<compile_context>
chip_gen: v7x
topology: tpu7x:2x2x1
jax: 0.10.0
libtpu: 0.0.40
codegen_flags: <defaults>
</compile_context>

<pallas_src>
import jax
import jax.numpy as jnp
from jax.experimental import pallas as pl
from jax.experimental.pallas import tpu as pltpu


def _round_up(x, m):
    return (x + m - 1) // m * m


# ----------------------------------------------------------------------------
# Pallas kernel: item/user towers + output head, all weights resident in VMEM.
# ----------------------------------------------------------------------------
def rs_kernel(
    ei_ref, eu_ref, catc_ref,
    iw1, ib1, iw2, ib2, iw3, ib3,
    uw1, ub1, uw2, ub2, uw3, ub3,
    ow1a, ow1bc, ow2, ob2, ow3, ob3,
    out_ref,
):
    def relu(x):
        return jnp.maximum(x, 0.0)

    def mm(x, w_ref):
        # bf16 x bf16 MXU matmul with f32 accumulation.
        return jnp.dot(x, w_ref[...], preferred_element_type=jnp.float32)

    def tower(e, w1, b1, w2, b2, w3, b3):
        h = relu(mm(e, w1) + b1[...]).astype(jnp.bfloat16)
        h = relu(mm(h, w2) + b2[...]).astype(jnp.bfloat16)
        h = relu(mm(h, w3) + b3[...]).astype(jnp.bfloat16)
        return h  # (TB, 50) bf16

    x_item = tower(ei_ref[...], iw1, ib1, iw2, ib2, iw3, ib3)
    x_user = tower(eu_ref[...], uw1, ub1, uw2, ub2, uw3, ub3)
    # NOTE: the PyTorch model also computes a gender tower whose result is
    # never used (it concatenates x_user twice instead). It is dropped here;
    # the output is identical.

    # concat([x_item, x_user, x_user, x_cat], -1) @ W1 + b1 expressed as
    # partial matmuls over 50-wide row slabs of W1.  The duplicated x_user
    # slab is pre-folded (ow1bc = W1[50:100] + W1[100:150]) and the category
    # tower's slab + b1 arrive precomputed per-row in catc_ref (f32).
    h = relu(mm(x_item, ow1a) + mm(x_user, ow1bc)
             + catc_ref[...]).astype(jnp.bfloat16)
    h = relu(mm(h, ow2) + ob2[...]).astype(jnp.bfloat16)
    # nn.Flatten() is identity for (TB, 100). Final weight is zero-padded
    # 6 -> 128 output lanes for a lane-dense (unmasked) store.
    out_ref[...] = mm(h, ow3) + ob3[...]


# ----------------------------------------------------------------------------
# Parameter construction (deterministic, synthetic).
# ----------------------------------------------------------------------------
def _linear(key, fin, fout):
    kw, kb = jax.random.split(key)
    w = jax.random.normal(kw, (fin, fout), jnp.float32) / jnp.sqrt(float(fin))
    b = jax.random.normal(kb, (1, fout), jnp.float32) * 0.01
    return w, b


def init_params(key, reduced_dim=True):
    item_size = 1000 if reduced_dim else 9560
    user_size = 1000 if reduced_dim else 1157633
    keys = iter(jax.random.split(key, 32))

    def tower_params(vocab, emb_dim):
        table = jax.random.normal(next(keys), (vocab, emb_dim), jnp.float32) * 0.1
        w1, b1 = _linear(next(keys), emb_dim, 200)
        w2, b2 = _linear(next(keys), 200, 100)
        w3, b3 = _linear(next(keys), 100, 50)
        return dict(table=table, w1=w1, b1=b1, w2=w2, b2=b2, w3=w3, b3=b3)

    params = dict(
        item=tower_params(item_size, 200),
        user=tower_params(user_size, 200),
        gender=tower_params(3, 10),        # kept for fidelity; never used
        category=tower_params(10, 10),
    )
    ow1, ob1 = _linear(next(keys), 200, 200)
    ow2, ob2 = _linear(next(keys), 200, 100)
    ow3, ob3 = _linear(next(keys), 100, 6)
    params["out"] = dict(w1=ow1, b1=ob1, w2=ow2, b2=ob2, w3=ow3, b3=ob3)
    return params


# ----------------------------------------------------------------------------
# Kernel-ready operands (shared by the Pallas wrapper and the bf16 reference).
# ----------------------------------------------------------------------------
def _cat_head_table(params):
    """(10, 200) f32: head-FC1 contribution of the category tower plus b1.

    category vocab is tiny (10), so the whole tower and its W1[150:200] slab
    (and the head bias b1) are folded into a per-category lookup table,
    computed with the same bf16/f32 numerics the kernel would have used.
    """
    t = params["category"]
    o = params["out"]
    bf16 = lambda a: a.astype(jnp.bfloat16)
    mm = lambda x, w: jnp.dot(x, w, preferred_element_type=jnp.float32)
    relu = lambda x: jnp.maximum(x, 0.0)

    h = relu(mm(bf16(t["table"]), bf16(t["w1"])) + t["b1"]).astype(jnp.bfloat16)
    h = relu(mm(h, bf16(t["w2"])) + t["b2"]).astype(jnp.bfloat16)
    h = relu(mm(h, bf16(t["w3"])) + t["b3"]).astype(jnp.bfloat16)
    ow1d = bf16(o["w1"][150:200, :])
    return mm(h, ow1d) + o["b1"]            # (10, 200) f32


def _kernel_weights(params):
    bf16 = lambda a: a.astype(jnp.bfloat16)

    def tower_ops(t):
        return [bf16(t["w1"]), t["b1"], bf16(t["w2"]), t["b2"],
                bf16(t["w3"]), t["b3"]]

    o = params["out"]
    ow1a = bf16(o["w1"][0:50, :])
    ow1bc = bf16(o["w1"][50:100, :] + o["w1"][100:150, :])  # folded dup. x_user slab
    ow3 = bf16(jnp.pad(o["w3"], ((0, 0), (0, 128 - o["w3"].shape[1]))))
    ob3 = jnp.pad(o["b3"], ((0, 0), (0, 128 - o["b3"].shape[1])))

    return (
        tower_ops(params["item"])
        + tower_ops(params["user"])
        + [ow1a, ow1bc, bf16(o["w2"]), o["b2"], ow3, ob3]
    )


# ----------------------------------------------------------------------------
# Wrapper: embedding gathers in XLA (bf16 tables), MLP hot path in Pallas.
# ----------------------------------------------------------------------------
def rs_forward(gender, item, user, category, params, *, block_b=512):
    del gender  # computed-but-unused in the original forward; dropped entirely
    B = item.shape[0]

    e_item = jnp.take(params["item"]["table"].astype(jnp.bfloat16), item, axis=0)
    e_user = jnp.take(params["user"]["table"].astype(jnp.bfloat16), user, axis=0)
    cat_contrib = jnp.take(_cat_head_table(params), category, axis=0)  # (B, 200) f32

    tb = min(block_b, _round_up(B, 8))
    b_pad = _round_up(B, tb)
    if b_pad != B:
        pad = ((0, b_pad - B), (0, 0))
        e_item = jnp.pad(e_item, pad)
        e_user = jnp.pad(e_user, pad)
        cat_contrib = jnp.pad(cat_contrib, pad)

    weights = _kernel_weights(params)

    def act_spec(feat):
        return pl.BlockSpec((tb, feat), lambda i: (i, 0))

    # Weights: full-array blocks with a constant index_map -> resident in VMEM.
    w_specs = [pl.BlockSpec(w.shape, lambda i: (0, 0)) for w in weights]

    out = pl.pallas_call(
        rs_kernel,
        grid=(b_pad // tb,),
        out_shape=jax.ShapeDtypeStruct((b_pad, 128), jnp.float32),
        in_specs=[act_spec(200), act_spec(200), act_spec(200)] + w_specs,
        out_specs=pl.BlockSpec((tb, 128), lambda i: (i, 0)),
        compiler_params=pltpu.CompilerParams(
            dimension_semantics=("parallel",)),
    )(e_item, e_user, cat_contrib, *weights)

    return out[:B, :6]


# ----------------------------------------------------------------------------
# References.
# ----------------------------------------------------------------------------
def rs_forward_ref_bf16(gender, item, user, category, params):
    """Mirrors the kernel's numerics (bf16 operands, f32 accumulation)."""
    del gender
    (iw1, ib1, iw2, ib2, iw3, ib3,
     uw1, ub1, uw2, ub2, uw3, ub3,
     ow1a, ow1bc, ow2, ob2, ow3, ob3) = _kernel_weights(params)

    mm = lambda x, w: jnp.dot(x, w, preferred_element_type=jnp.float32)
    relu = lambda x: jnp.maximum(x, 0.0)

    def tower(tbl, idx, w1, b1, w2, b2, w3, b3):
        e = jnp.take(tbl.astype(jnp.bfloat16), idx, axis=0)
        h = relu(mm(e, w1) + b1).astype(jnp.bfloat16)
        h = relu(mm(h, w2) + b2).astype(jnp.bfloat16)
        h = relu(mm(h, w3) + b3).astype(jnp.bfloat16)
        return h

    x_item = tower(params["item"]["table"], item, iw1, ib1, iw2, ib2, iw3, ib3)
    x_user = tower(params["user"]["table"], user, uw1, ub1, uw2, ub2, uw3, ub3)
    cat_contrib = jnp.take(_cat_head_table(params), category, axis=0)

    h = relu(mm(x_item, ow1a) + mm(x_user, ow1bc) + cat_contrib).astype(jnp.bfloat16)
    h = relu(mm(h, ow2) + ob2).astype(jnp.bfloat16)
    return (mm(h, ow3) + ob3)[:, :6]


def rs_forward_ref_f32(gender, item, user, category, params):
    """Pure f32 JAX reference reproducing the PyTorch module exactly."""
    def tower(idx, t):
        h = jnp.take(t["table"], idx, axis=0)
        h = jnp.maximum(h @ t["w1"] + t["b1"], 0.0)
        h = jnp.maximum(h @ t["w2"] + t["b2"], 0.0)
        h = jnp.maximum(h @ t["w3"] + t["b3"], 0.0)
        return h

    x_item = tower(item, params["item"])
    x_user = tower(user, params["user"])
    _x_gender = tower(gender, params["gender"])   # unused, matching torch
    x_cat = tower(category, params["category"])
    x = jnp.concatenate([x_item, x_user, x_user, x_cat], axis=-1)
    o = params["out"]
    x = jnp.maximum(x @ o["w1"] + o["b1"], 0.0)
    x = jnp.maximum(x @ o["w2"] + o["b2"], 0.0)
    return x @ o["w3"] + o["b3"]


if __name__ == "__main__":
    key = jax.random.PRNGKey(0)
    kp, kg, ki, ku, kc = jax.random.split(key, 5)

    params = init_params(kp, reduced_dim=True)

    B = 8
    gender = jax.random.randint(kg, (B,), 0, 3, dtype=jnp.int32)
    item = jax.random.randint(ki, (B,), 0, 1000, dtype=jnp.int32)
    user = jax.random.randint(ku, (B,), 0, 1000, dtype=jnp.int32)
    category = jax.random.randint(kc, (B,), 0, 10, dtype=jnp.int32)

    out = jax.block_until_ready(rs_forward(gender, item, user, category, params))
    assert out.shape == (B, 6), out.shape

    # Tight check against a JAX reference with identical bf16/f32 numerics.
    ref_bf16 = rs_forward_ref_bf16(gender, item, user, category, params)
    assert jnp.allclose(out, ref_bf16, atol=1e-3, rtol=1e-3), \
        "mismatch vs bf16-consistent reference"

    # Loose check against the full-f32 module semantics (bf16 rounding only).
    ref_f32 = rs_forward_ref_f32(gender, item, user, category, params)
    assert jnp.allclose(out, ref_f32, atol=3e-2, rtol=3e-2), \
        "mismatch vs f32 module semantics"

    print("KERNEL_OK")
</pallas_src>

<mosaic_0001>
module attributes {stable_mosaic.version = 11 : i64} {
  func.func @rs_kernel(%arg0: i32, %arg1: memref<8x200xbf16, #tpu.memory_space<vmem>>, %arg2: memref<8x200xbf16, #tpu.memory_space<vmem>>, %arg3: memref<8x200xf32, #tpu.memory_space<vmem>>, %arg4: memref<200x200xbf16, #tpu.memory_space<vmem>>, %arg5: memref<1x200xf32, #tpu.memory_space<vmem>>, %arg6: memref<200x100xbf16, #tpu.memory_space<vmem>>, %arg7: memref<1x100xf32, #tpu.memory_space<vmem>>, %arg8: memref<100x50xbf16, #tpu.memory_space<vmem>>, %arg9: memref<1x50xf32, #tpu.memory_space<vmem>>, %arg10: memref<200x200xbf16, #tpu.memory_space<vmem>>, %arg11: memref<1x200xf32, #tpu.memory_space<vmem>>, %arg12: memref<200x100xbf16, #tpu.memory_space<vmem>>, %arg13: memref<1x100xf32, #tpu.memory_space<vmem>>, %arg14: memref<100x50xbf16, #tpu.memory_space<vmem>>, %arg15: memref<1x50xf32, #tpu.memory_space<vmem>>, %arg16: memref<50x200xbf16, #tpu.memory_space<vmem>>, %arg17: memref<50x200xbf16, #tpu.memory_space<vmem>>, %arg18: memref<200x100xbf16, #tpu.memory_space<vmem>>, %arg19: memref<1x100xf32, #tpu.memory_space<vmem>>, %arg20: memref<100x128xbf16, #tpu.memory_space<vmem>>, %arg21: memref<1x128xf32, #tpu.memory_space<vmem>>, %arg22: memref<8x128xf32, #tpu.memory_space<vmem>>) attributes {dimension_semantics = [#tpu.dimension_semantics<parallel>], iteration_bounds = array<i64: 1>, scalar_prefetch = 0 : i64, scratch_operands = 0 : i64, tpu.core_type = #tpu.core_type<tc>, window_params = [{transform_indices = @transform_0, window_bounds = array<i64: 8, 200>}, {transform_indices = @transform_1, window_bounds = array<i64: 8, 200>}, {transform_indices = @transform_2, window_bounds = array<i64: 8, 200>}, {pipeline_mode = #tpu.pipeline_mode<synchronous>, transform_indices = @transform_3, window_bounds = array<i64: 200, 200>}, {pipeline_mode = #tpu.pipeline_mode<synchronous>, transform_indices = @transform_4, window_bounds = array<i64: 1, 200>}, {pipeline_mode = #tpu.pipeline_mode<synchronous>, transform_indices = @transform_5, window_bounds = array<i64: 200, 100>}, {pipeline_mode = #tpu.pipeline_mode<synchronous>, transform_indices = @transform_6, window_bounds = array<i64: 1, 100>}, {pipeline_mode = #tpu.pipeline_mode<synchronous>, transform_indices = @transform_7, window_bounds = array<i64: 100, 50>}, {pipeline_mode = #tpu.pipeline_mode<synchronous>, transform_indices = @transform_8, window_bounds = array<i64: 1, 50>}, {pipeline_mode = #tpu.pipeline_mode<synchronous>, transform_indices = @transform_9, window_bounds = array<i64: 200, 200>}, {pipeline_mode = #tpu.pipeline_mode<synchronous>, transform_indices = @transform_10, window_bounds = array<i64: 1, 200>}, {pipeline_mode = #tpu.pipeline_mode<synchronous>, transform_indices = @transform_11, window_bounds = array<i64: 200, 100>}, {pipeline_mode = #tpu.pipeline_mode<synchronous>, transform_indices = @transform_12, window_bounds = array<i64: 1, 100>}, {pipeline_mode = #tpu.pipeline_mode<synchronous>, transform_indices = @transform_13, window_bounds = array<i64: 100, 50>}, {pipeline_mode = #tpu.pipeline_mode<synchronous>, transform_indices = @transform_14, window_bounds = array<i64: 1, 50>}, {pipeline_mode = #tpu.pipeline_mode<synchronous>, transform_indices = @transform_15, window_bounds = array<i64: 50, 200>}, {pipeline_mode = #tpu.pipeline_mode<synchronous>, transform_indices = @transform_16, window_bounds = array<i64: 50, 200>}, {pipeline_mode = #tpu.pipeline_mode<synchronous>, transform_indices = @transform_17, window_bounds = array<i64: 200, 100>}, {pipeline_mode = #tpu.pipeline_mode<synchronous>, transform_indices = @transform_18, window_bounds = array<i64: 1, 100>}, {pipeline_mode = #tpu.pipeline_mode<synchronous>, transform_indices = @transform_19, window_bounds = array<i64: 100, 128>}, {pipeline_mode = #tpu.pipeline_mode<synchronous>, transform_indices = @transform_20, window_bounds = array<i64: 1, 128>}, {transform_indices = @transform_21, window_bounds = array<i64: 8, 128>}]} {
    %c0 = arith.constant 0 : index
    %c0_0 = arith.constant 0 : index
    %0 = vector.load %arg1[%c0, %c0_0] : memref<8x200xbf16, #tpu.memory_space<vmem>>, vector<8x200xbf16>
    %c0_1 = arith.constant 0 : index
    %c0_2 = arith.constant 0 : index
    %1 = vector.load %arg4[%c0_1, %c0_2] : memref<200x200xbf16, #tpu.memory_space<vmem>>, vector<200x200xbf16>
    %cst = arith.constant dense<0.000000e+00> : vector<8x200xf32>
    %2 = tpu.matmul %0, %1, %cst {dimension_numbers = #tpu.dot_dimension_numbers<[1], [0], [0], [1], [0, 0, 1, 1], [], []>} : vector<8x200xbf16>, vector<200x200xbf16>, vector<8x200xf32> -> vector<8x200xf32>
    %c0_3 = arith.constant 0 : index
    %c0_4 = arith.constant 0 : index
    %3 = vector.load %arg5[%c0_3, %c0_4] : memref<1x200xf32, #tpu.memory_space<vmem>>, vector<1x200xf32>
    %4 = vector.broadcast %3 : vector<1x200xf32> to vector<8x200xf32>
    %5 = arith.addf %2, %4 : vector<8x200xf32>
    %cst_5 = arith.constant 0.000000e+00 : f32
    %6 = vector.broadcast %cst_5 : f32 to vector<8x200xf32>
    %7 = arith.maximumf %5, %6 : vector<8x200xf32>
    %8 = arith.truncf %7 : vector<8x200xf32> to vector<8x200xbf16>
    %c0_6 = arith.constant 0 : index
    %c0_7 = arith.constant 0 : index
    %9 = vector.load %arg6[%c0_6, %c0_7] : memref<200x100xbf16, #tpu.memory_space<vmem>>, vector<200x100xbf16>
    %cst_8 = arith.constant dense<0.000000e+00> : vector<8x100xf32>
    %10 = tpu.matmul %8, %9, %cst_8 {dimension_numbers = #tpu.dot_dimension_numbers<[1], [0], [0], [1], [0, 0, 1, 1], [], []>} : vector<8x200xbf16>, vector<200x100xbf16>, vector<8x100xf32> -> vector<8x100xf32>
    %c0_9 = arith.constant 0 : index
    %c0_10 = arith.constant 0 : index
    %11 = vector.load %arg7[%c0_9, %c0_10] : memref<1x100xf32, #tpu.memory_space<vmem>>, vector<1x100xf32>
    %12 = vector.broadcast %11 : vector<1x100xf32> to vector<8x100xf32>
    %13 = arith.addf %10, %12 : vector<8x100xf32>
    %cst_11 = arith.constant 0.000000e+00 : f32
    %14 = vector.broadcast %cst_11 : f32 to vector<8x100xf32>
    %15 = arith.maximumf %13, %14 : vector<8x100xf32>
    %16 = arith.truncf %15 : vector<8x100xf32> to vector<8x100xbf16>
    %c0_12 = arith.constant 0 : index
    %c0_13 = arith.constant 0 : index
    %17 = vector.load %arg8[%c0_12, %c0_13] : memref<100x50xbf16, #tpu.memory_space<vmem>>, vector<100x50xbf16>
    %cst_14 = arith.constant dense<0.000000e+00> : vector<8x50xf32>
    %18 = tpu.matmul %16, %17, %cst_14 {dimension_numbers = #tpu.dot_dimension_numbers<[1], [0], [0], [1], [0, 0, 1, 1], [], []>} : vector<8x100xbf16>, vector<100x50xbf16>, vector<8x50xf32> -> vector<8x50xf32>
    %c0_15 = arith.constant 0 : index
    %c0_16 = arith.constant 0 : index
    %19 = vector.load %arg9[%c0_15, %c0_16] : memref<1x50xf32, #tpu.memory_space<vmem>>, vector<1x50xf32>
    %20 = vector.broadcast %19 : vector<1x50xf32> to vector<8x50xf32>
    %21 = arith.addf %18, %20 : vector<8x50xf32>
    %cst_17 = arith.constant 0.000000e+00 : f32
    %22 = vector.broadcast %cst_17 : f32 to vector<8x50xf32>
    %23 = arith.maximumf %21, %22 : vector<8x50xf32>
    %24 = arith.truncf %23 : vector<8x50xf32> to vector<8x50xbf16>
    %c0_18 = arith.constant 0 : index
    %c0_19 = arith.constant 0 : index
    %25 = vector.load %arg2[%c0_18, %c0_19] : memref<8x200xbf16, #tpu.memory_space<vmem>>, vector<8x200xbf16>
    %c0_20 = arith.constant 0 : index
    %c0_21 = arith.constant 0 : index
    %26 = vector.load %arg10[%c0_20, %c0_21] : memref<200x200xbf16, #tpu.memory_space<vmem>>, vector<200x200xbf16>
    %cst_22 = arith.constant dense<0.000000e+00> : vector<8x200xf32>
    %27 = tpu.matmul %25, %26, %cst_22 {dimension_numbers = #tpu.dot_dimension_numbers<[1], [0], [0], [1], [0, 0, 1, 1], [], []>} : vector<8x200xbf16>, vector<200x200xbf16>, vector<8x200xf32> -> vector<8x200xf32>
    %c0_23 = arith.constant 0 : index
    %c0_24 = arith.constant 0 : index
    %28 = vector.load %arg11[%c0_23, %c0_24] : memref<1x200xf32, #tpu.memory_space<vmem>>, vector<1x200xf32>
    %29 = vector.broadcast %28 : vector<1x200xf32> to vector<8x200xf32>
    %30 = arith.addf %27, %29 : vector<8x200xf32>
    %cst_25 = arith.constant 0.000000e+00 : f32
    %31 = vector.broadcast %cst_25 : f32 to vector<8x200xf32>
    %32 = arith.maximumf %30, %31 : vector<8x200xf32>
    %33 = arith.truncf %32 : vector<8x200xf32> to vector<8x200xbf16>
    %c0_26 = arith.constant 0 : index
    %c0_27 = arith.constant 0 : index
    %34 = vector.load %arg12[%c0_26, %c0_27] : memref<200x100xbf16, #tpu.memory_space<vmem>>, vector<200x100xbf16>
    %cst_28 = arith.constant dense<0.000000e+00> : vector<8x100xf32>
    %35 = tpu.matmul %33, %34, %cst_28 {dimension_numbers = #tpu.dot_dimension_numbers<[1], [0], [0], [1], [0, 0, 1, 1], [], []>} : vector<8x200xbf16>, vector<200x100xbf16>, vector<8x100xf32> -> vector<8x100xf32>
    %c0_29 = arith.constant 0 : index
    %c0_30 = arith.constant 0 : index
    %36 = vector.load %arg13[%c0_29, %c0_30] : memref<1x100xf32, #tpu.memory_space<vmem>>, vector<1x100xf32>
    %37 = vector.broadcast %36 : vector<1x100xf32> to vector<8x100xf32>
    %38 = arith.addf %35, %37 : vector<8x100xf32>
    %cst_31 = arith.constant 0.000000e+00 : f32
    %39 = vector.broadcast %cst_31 : f32 to vector<8x100xf32>
    %40 = arith.maximumf %38, %39 : vector<8x100xf32>
    %41 = arith.truncf %40 : vector<8x100xf32> to vector<8x100xbf16>
    %c0_32 = arith.constant 0 : index
    %c0_33 = arith.constant 0 : index
    %42 = vector.load %arg14[%c0_32, %c0_33] : memref<100x50xbf16, #tpu.memory_space<vmem>>, vector<100x50xbf16>
    %cst_34 = arith.constant dense<0.000000e+00> : vector<8x50xf32>
    %43 = tpu.matmul %41, %42, %cst_34 {dimension_numbers = #tpu.dot_dimension_numbers<[1], [0], [0], [1], [0, 0, 1, 1], [], []>} : vector<8x100xbf16>, vector<100x50xbf16>, vector<8x50xf32> -> vector<8x50xf32>
    %c0_35 = arith.constant 0 : index
    %c0_36 = arith.constant 0 : index
    %44 = vector.load %arg15[%c0_35, %c0_36] : memref<1x50xf32, #tpu.memory_space<vmem>>, vector<1x50xf32>
    %45 = vector.broadcast %44 : vector<1x50xf32> to vector<8x50xf32>
    %46 = arith.addf %43, %45 : vector<8x50xf32>
    %cst_37 = arith.constant 0.000000e+00 : f32
    %47 = vector.broadcast %cst_37 : f32 to vector<8x50xf32>
    %48 = arith.maximumf %46, %47 : vector<8x50xf32>
    %49 = arith.truncf %48 : vector<8x50xf32> to vector<8x50xbf16>
    %c0_38 = arith.constant 0 : index
    %c0_39 = arith.constant 0 : index
    %50 = vector.load %arg16[%c0_38, %c0_39] : memref<50x200xbf16, #tpu.memory_space<vmem>>, vector<50x200xbf16>
    %cst_40 = arith.constant dense<0.000000e+00> : vector<8x200xf32>
    %51 = tpu.matmul %24, %50, %cst_40 {dimension_numbers = #tpu.dot_dimension_numbers<[1], [0], [0], [1], [0, 0, 1, 1], [], []>} : vector<8x50xbf16>, vector<50x200xbf16>, vector<8x200xf32> -> vector<8x200xf32>
    %c0_41 = arith.constant 0 : index
    %c0_42 = arith.constant 0 : index
    %52 = vector.load %arg17[%c0_41, %c0_42] : memref<50x200xbf16, #tpu.memory_space<vmem>>, vector<50x200xbf16>
    %cst_43 = arith.constant dense<0.000000e+00> : vector<8x200xf32>
    %53 = tpu.matmul %49, %52, %cst_43 {dimension_numbers = #tpu.dot_dimension_numbers<[1], [0], [0], [1], [0, 0, 1, 1], [], []>} : vector<8x50xbf16>, vector<50x200xbf16>, vector<8x200xf32> -> vector<8x200xf32>
    %54 = arith.addf %51, %53 : vector<8x200xf32>
    %c0_44 = arith.constant 0 : index
    %c0_45 = arith.constant 0 : index
    %55 = vector.load %arg3[%c0_44, %c0_45] : memref<8x200xf32, #tpu.memory_space<vmem>>, vector<8x200xf32>
    %56 = arith.addf %54, %55 : vector<8x200xf32>
    %cst_46 = arith.constant 0.000000e+00 : f32
    %57 = vector.broadcast %cst_46 : f32 to vector<8x200xf32>
    %58 = arith.maximumf %56, %57 : vector<8x200xf32>
    %59 = arith.truncf %58 : vector<8x200xf32> to vector<8x200xbf16>
    %c0_47 = arith.constant 0 : index
    %c0_48 = arith.constant 0 : index
    %60 = vector.load %arg18[%c0_47, %c0_48] : memref<200x100xbf16, #tpu.memory_space<vmem>>, vector<200x100xbf16>
    %cst_49 = arith.constant dense<0.000000e+00> : vector<8x100xf32>
    %61 = tpu.matmul %59, %60, %cst_49 {dimension_numbers = #tpu.dot_dimension_numbers<[1], [0], [0], [1], [0, 0, 1, 1], [], []>} : vector<8x200xbf16>, vector<200x100xbf16>, vector<8x100xf32> -> vector<8x100xf32>
    %c0_50 = arith.constant 0 : index
    %c0_51 = arith.constant 0 : index
    %62 = vector.load %arg19[%c0_50, %c0_51] : memref<1x100xf32, #tpu.memory_space<vmem>>, vector<1x100xf32>
    %63 = vector.broadcast %62 : vector<1x100xf32> to vector<8x100xf32>
    %64 = arith.addf %61, %63 : vector<8x100xf32>
    %cst_52 = arith.constant 0.000000e+00 : f32
    %65 = vector.broadcast %cst_52 : f32 to vector<8x100xf32>
    %66 = arith.maximumf %64, %65 : vector<8x100xf32>
    %67 = arith.truncf %66 : vector<8x100xf32> to vector<8x100xbf16>
    %c0_53 = arith.constant 0 : index
    %c0_54 = arith.constant 0 : index
    %68 = vector.load %arg20[%c0_53, %c0_54] : memref<100x128xbf16, #tpu.memory_space<vmem>>, vector<100x128xbf16>
    %cst_55 = arith.constant dense<0.000000e+00> : vector<8x128xf32>
    %69 = tpu.matmul %67, %68, %cst_55 {dimension_numbers = #tpu.dot_dimension_numbers<[1], [0], [0], [1], [0, 0, 1, 1], [], []>} : vector<8x100xbf16>, vector<100x128xbf16>, vector<8x128xf32> -> vector<8x128xf32>
    %c0_56 = arith.constant 0 : index
    %c0_57 = arith.constant 0 : index
    %70 = vector.load %arg21[%c0_56, %c0_57] : memref<1x128xf32, #tpu.memory_space<vmem>>, vector<1x128xf32>
    %71 = vector.broadcast %70 : vector<1x128xf32> to vector<8x128xf32>
    %72 = arith.addf %69, %71 : vector<8x128xf32>
    %c0_58 = arith.constant 0 : index
    %c0_59 = arith.constant 0 : index
    %73 = vector.load %arg22[%c0_58, %c0_59] : memref<8x128xf32, #tpu.memory_space<vmem>>, vector<8x128xf32>
    tpu.vector_store %arg22[%c0_58, %c0_59], %72 {strides = array<i32>} : memref<8x128xf32, #tpu.memory_space<vmem>>, vector<8x128xf32>,
    return
  }
  func.func @transform_0(%arg0: i32) -> (i32, i32) {
    %c0_i32 = arith.constant 0 : i32
    %c0_i32_0 = arith.constant 0 : i32
    return %arg0, %c0_i32 : i32, i32
  }
  func.func @transform_1(%arg0: i32) -> (i32, i32) {
    %c0_i32 = arith.constant 0 : i32
    %c0_i32_0 = arith.constant 0 : i32
    return %arg0, %c0_i32 : i32, i32
  }
  func.func @transform_2(%arg0: i32) -> (i32, i32) {
    %c0_i32 = arith.constant 0 : i32
    %c0_i32_0 = arith.constant 0 : i32
    return %arg0, %c0_i32 : i32, i32
  }
  func.func @transform_3(%arg0: i32) -> (i32, i32) {
    %c0_i32 = arith.constant 0 : i32
    %c0_i32_0 = arith.constant 0 : i32
    %c0_i32_1 = arith.constant 0 : i32
    return %c0_i32, %c0_i32_0 : i32, i32
  }
  func.func @transform_4(%arg0: i32) -> (i32, i32) {
    %c0_i32 = arith.constant 0 : i32
    %c0_i32_0 = arith.constant 0 : i32
    %c0_i32_1 = arith.constant 0 : i32
    return %c0_i32, %c0_i32_0 : i32, i32
  }
  func.func @transform_5(%arg0: i32) -> (i32, i32) {
    %c0_i32 = arith.constant 0 : i32
    %c0_i32_0 = arith.constant 0 : i32
    %c0_i32_1 = arith.constant 0 : i32
    return %c0_i32, %c0_i32_0 : i32, i32
  }
  func.func @transform_6(%arg0: i32) -> (i32, i32) {
    %c0_i32 = arith.constant 0 : i32
    %c0_i32_0 = arith.constant 0 : i32
    %c0_i32_1 = arith.constant 0 : i32
    return %c0_i32, %c0_i32_0 : i32, i32
  }
  func.func @transform_7(%arg0: i32) -> (i32, i32) {
    %c0_i32 = arith.constant 0 : i32
    %c0_i32_0 = arith.constant 0 : i32
    %c0_i32_1 = arith.constant 0 : i32
    return %c0_i32, %c0_i32_0 : i32, i32
  }
  func.func @transform_8(%arg0: i32) -> (i32, i32) {
    %c0_i32 = arith.constant 0 : i32
    %c0_i32_0 = arith.constant 0 : i32
    %c0_i32_1 = arith.constant 0 : i32
    return %c0_i32, %c0_i32_0 : i32, i32
  }
  func.func @transform_9(%arg0: i32) -> (i32, i32) {
    %c0_i32 = arith.constant 0 : i32
    %c0_i32_0 = arith.constant 0 : i32
    %c0_i32_1 = arith.constant 0 : i32
    return %c0_i32, %c0_i32_0 : i32, i32
  }
  func.func @transform_10(%arg0: i32) -> (i32, i32) {
    %c0_i32 = arith.constant 0 : i32
    %c0_i32_0 = arith.constant 0 : i32
    %c0_i32_1 = arith.constant 0 : i32
    return %c0_i32, %c0_i32_0 : i32, i32
  }
  func.func @transform_11(%arg0: i32) -> (i32, i32) {
    %c0_i32 = arith.constant 0 : i32
    %c0_i32_0 = arith.constant 0 : i32
    %c0_i32_1 = arith.constant 0 : i32
    return %c0_i32, %c0_i32_0 : i32, i32
  }
  func.func @transform_12(%arg0: i32) -> (i32, i32) {
    %c0_i32 = arith.constant 0 : i32
    %c0_i32_0 = arith.constant 0 : i32
    %c0_i32_1 = arith.constant 0 : i32
    return %c0_i32, %c0_i32_0 : i32, i32
  }
  func.func @transform_13(%arg0: i32) -> (i32, i32) {
    %c0_i32 = arith.constant 0 : i32
    %c0_i32_0 = arith.constant 0 : i32
    %c0_i32_1 = arith.constant 0 : i32
    return %c0_i32, %c0_i32_0 : i32, i32
  }
  func.func @transform_14(%arg0: i32) -> (i32, i32) {
    %c0_i32 = arith.constant 0 : i32
    %c0_i32_0 = arith.constant 0 : i32
    %c0_i32_1 = arith.constant 0 : i32
    return %c0_i32, %c0_i32_0 : i32, i32
  }
  func.func @transform_15(%arg0: i32) -> (i32, i32) {
    %c0_i32 = arith.constant 0 : i32
    %c0_i32_0 = arith.constant 0 : i32
    %c0_i32_1 = arith.constant 0 : i32
    return %c0_i32, %c0_i32_0 : i32, i32
  }
  func.func @transform_16(%arg0: i32) -> (i32, i32) {
    %c0_i32 = arith.constant 0 : i32
    %c0_i32_0 = arith.constant 0 : i32
    %c0_i32_1 = arith.constant 0 : i32
    return %c0_i32, %c0_i32_0 : i32, i32
  }
  func.func @transform_17(%arg0: i32) -> (i32, i32) {
    %c0_i32 = arith.constant 0 : i32
    %c0_i32_0 = arith.constant 0 : i32
    %c0_i32_1 = arith.constant 0 : i32
    return %c0_i32, %c0_i32_0 : i32, i32
  }
  func.func @transform_18(%arg0: i32) -> (i32, i32) {
    %c0_i32 = arith.constant 0 : i32
    %c0_i32_0 = arith.constant 0 : i32
    %c0_i32_1 = arith.constant 0 : i32
    return %c0_i32, %c0_i32_0 : i32, i32
  }
  func.func @transform_19(%arg0: i32) -> (i32, i32) {
    %c0_i32 = arith.constant 0 : i32
    %c0_i32_0 = arith.constant 0 : i32
    %c0_i32_1 = arith.constant 0 : i32
    return %c0_i32, %c0_i32_0 : i32, i32
  }
  func.func @transform_20(%arg0: i32) -> (i32, i32) {
    %c0_i32 = arith.constant 0 : i32
    %c0_i32_0 = arith.constant 0 : i32
    %c0_i32_1 = arith.constant 0 : i32
    return %c0_i32, %c0_i32_0 : i32, i32
  }
  func.func @transform_21(%arg0: i32) -> (i32, i32) {
    %c0_i32 = arith.constant 0 : i32
    %c0_i32_0 = arith.constant 0 : i32
    return %arg0, %c0_i32 : i32, i32
  }
}

</mosaic_0001>

<llo_original>
// kernel: tpu_custom_call.1
$region0: #{tpu_custom_call.1}
  #allocation0 [shape = 'u32[]', space=smem, size = 0x4, offset = 0x4, fixed_abs, tag = 'smem constant byte address 0x4 - core index']
  #allocation1 [shape = 'u32[144,128]{1,0:T(1,128)}', space=vmem, size = 0x12000, scoped, tag = 'internal scratch']
  %s0 = inlined_call_operand.hbm [shape: bf16[8,200], index: 0, kind: input, shape index: {}]
  %s1 = inlined_call_operand.hbm [shape: bf16[8,200], index: 1, kind: input, shape index: {}]
  %s2 = inlined_call_operand.hbm [shape: f32[8,200], index: 2, kind: input, shape index: {}]
  %s3 = inlined_call_operand.hbm [shape: bf16[200,200], index: 3, kind: input, shape index: {}]
  %s4 = inlined_call_operand.hbm [shape: f32[1,200], index: 4, kind: input, shape index: {}]
  %s5 = inlined_call_operand.vmem [shape: bf16[200,100], index: 5, kind: input, shape index: {}]
  %s6 = inlined_call_operand.vmem [shape: f32[1,100], index: 6, kind: input, shape index: {}]
  %s7 = inlined_call_operand.vmem [shape: bf16[100,50], index: 7, kind: input, shape index: {}]
  %s8 = inlined_call_operand.hbm [shape: f32[1,50], index: 8, kind: input, shape index: {}]
  %s9 = inlined_call_operand.hbm [shape: bf16[200,200], index: 9, kind: input, shape index: {}]
  %s10 = inlined_call_operand.hbm [shape: f32[1,200], index: 10, kind: input, shape index: {}]
  %s11 = inlined_call_operand.vmem [shape: bf16[200,100], index: 11, kind: input, shape index: {}]
  %s12 = inlined_call_operand.vmem [shape: f32[1,100], index: 12, kind: input, shape index: {}]
  %s13 = inlined_call_operand.vmem [shape: bf16[100,50], index: 13, kind: input, shape index: {}]
  %s14 = inlined_call_operand.vmem [shape: f32[1,50], index: 14, kind: input, shape index: {}]
  %s15 = inlined_call_operand.hbm [shape: bf16[50,200], index: 15, kind: input, shape index: {}]
  %s16 = inlined_call_operand.hbm [shape: bf16[50,200], index: 16, kind: input, shape index: {}]
  %s17 = inlined_call_operand.hbm [shape: bf16[200,100], index: 17, kind: input, shape index: {}]
  %s18 = inlined_call_operand.vmem [shape: f32[1,100], index: 18, kind: input, shape index: {}]
  %s19 = inlined_call_operand.hbm [shape: bf16[100,128], index: 19, kind: input, shape index: {}]
  %s20 = inlined_call_operand.vmem [shape: f32[1,128], index: 20, kind: input, shape index: {}]
  %s21 = inlined_call_operand.hbm [shape: f32[8,128], index: 21, kind: output, shape index: {}]
  %s22 = sld [smem:[#allocation0]]
  $region142: #{tpu_custom_call.1} parent=0
    _
  %s24 = ssub.s32 1, %s22
  %s25 = scalar_select 0, %s24, %s22
  $region1: #{tpu_custom_call.1} parent=0
    #allocation2 [shape = 'u8[4096]{0}', space=vmem, size = 0x1000, scoped, tag = 'input window, operand 0, single buffered']
    #allocation3 [shape = 's32[1]{0}', space=sflag, size = 0x4, scoped, tag = 'scoped memory for tpu_custom_call.1']
    #allocation4 [shape = 's32[1]{0}', space=sflag, size = 0x4, scoped, tag = 'scoped memory for tpu_custom_call.1']
    #allocation5 [shape = 'u8[4096]{0}', space=vmem, size = 0x1000, scoped, tag = 'input window, operand 1, single buffered']
    #allocation6 [shape = 's32[1]{0}', space=sflag, size = 0x4, scoped, tag = 'scoped memory for tpu_custom_call.1']
    #allocation7 [shape = 'u8[8192]{0}', space=vmem, size = 0x2000, scoped, tag = 'input window, operand 2, single buffered']
    #allocation8 [shape = 'u8[102400]{0}', space=vmem, size = 0x19000, scoped, tag = 'input window, operand 3, single buffered']
    #allocation9 [shape = 's32[1]{0}', space=sflag, size = 0x4, scoped, tag = 'scoped memory for tpu_custom_call.1']
    #allocation10 [shape = 'u8[1024]{0}', space=vmem, size = 0x400, scoped, tag = 'input window, operand 4, single buffered']
    #allocation11 [shape = 'u8[512]{0}', space=vmem, size = 0x400, scoped, tag = 'input window, operand 8, single buffered']
    #allocation12 [shape = 's32[1]{0}', space=sflag, size = 0x4, scoped, tag = 'scoped memory for tpu_custom_call.1']
    #allocation13 [shape = 'u8[102400]{0}', space=vmem, size = 0x19000, scoped, tag = 'input window, operand 9, single buffered']
    #allocation14 [shape = 'u8[1024]{0}', space=vmem, size = 0x400, scoped, tag = 'input window, operand 10, single buffered']
    #allocation15 [shape = 's32[1]{0}', space=sflag, size = 0x4, scoped, tag = 'scoped memory for tpu_custom_call.1']
    #allocation16 [shape = 'u8[28672]{0}', space=vmem, size = 0x7000, scoped, tag = 'input window, operand 15, single buffered']
    #allocation17 [shape = 'u8[28672]{0}', space=vmem, size = 0x7000, scoped, tag = 'input window, operand 16, single buffered']
    #allocation18 [shape = 's32[1]{0}', space=sflag, size = 0x4, scoped, tag = 'scoped memory for tpu_custom_call.1']
    #allocation19 [shape = 'u8[51200]{0}', space=vmem, size = 0xc800, scoped, tag = 'input window, operand 17, single buffered']
    #allocation20 [shape = 'u8[26624]{0}', space=vmem, size = 0x6800, scoped, tag = 'input window, operand 19, single buffered']
    #allocation21 [shape = 's32[1]{0}', space=sflag, size = 0x4, scoped, tag = 'scoped memory for tpu_custom_call.1']
    #allocation22 [shape = 'u8[4096]{0}', space=vmem, size = 0x1000, scoped, tag = 'output window, operand 0, single buffered']
    %26 = vsyncpa [#allocation3], 0
    %27 = vsyncpa [#allocation6], 0
    %28 = vsyncpa [#allocation9], 0
    %29 = vsyncpa [#allocation12], 0
    %30 = vsyncpa [#allocation15], 0
    %31 = vsyncpa [#allocation18], 0
    %32 = vsyncpa [#allocation21], 0
    %33 = vsyncpa [#allocation4], 0
    // Predicated region
    $region2: #{tpu_custom_call.1} parent=1 // pred_check
      _
    $region3: #{tpu_custom_call.1} parent=1 // pred_check_branch
      %35 = sbr.rel (0) target = $region5
    $region4: #{tpu_custom_call.1} parent=1 // pred_region
      %s37 = ssub.s32 128, 128
      %38 = vsyncadd [#allocation3], %s37
      %s40 = sshll.u32 [#allocation2], 4
      %s41 = int_to_ptr.vmem [resolvable:$true] %s40
      %43 = dma.hbm_to_vmem [thread:$0]  %s0, 128, %s41, [#allocation3]
    $region5: #{tpu_custom_call.1} parent=1 // pred_fallthru
      _
    // Predicated region
    $region6: #{tpu_custom_call.1} parent=1 // pred_check
      _
    $region7: #{tpu_custom_call.1} parent=1 // pred_check_branch
      %45 = sbr.rel (0) target = $region9
    $region8: #{tpu_custom_call.1} parent=1 // pred_region
      %s47 = ssub.s32 128, 128
      %48 = vsyncadd [#allocation6], %s47
      %s50 = sshll.u32 [#allocation5], 4
      %s51 = int_to_ptr.vmem [resolvable:$true] %s50
      %53 = dma.hbm_to_vmem [thread:$0]  %s1, 128, %s51, [#allocation6]
    $region9: #{tpu_custom_call.1} parent=1 // pred_fallthru
      _
    // Predicated region
    $region10: #{tpu_custom_call.1} parent=1 // pred_check
      _
    $region11: #{tpu_custom_call.1} parent=1 // pred_check_branch
      %55 = sbr.rel (0) target = $region13
    $region12: #{tpu_custom_call.1} parent=1 // pred_region
      %s57 = ssub.s32 256, 256
      %58 = vsyncadd [#allocation6], %s57
      %s60 = sshll.u32 [#allocation7], 4
      %s61 = int_to_ptr.vmem [resolvable:$true] %s60
      %63 = dma.hbm_to_vmem [thread:$0]  %s2, 256, %s61, [#allocation6]
    $region13: #{tpu_custom_call.1} parent=1 // pred_fallthru
      _
    // Predicated region
    $region14: #{tpu_custom_call.1} parent=1 // pred_check
      _
    $region15: #{tpu_custom_call.1} parent=1 // pred_check_branch
      %65 = sbr.rel (0) target = $region17
    $region16: #{tpu_custom_call.1} parent=1 // pred_region
      %s67 = ssub.s32 3200, 3200
      %68 = vsyncadd [#allocation9], %s67
      %s69 = sshll.u32 [#allocation8], 4
      %s70 = int_to_ptr.vmem [resolvable:$true] %s69
      %75 = dma.hbm_to_vmem [thread:$0]  %s3, 3200, %s70, [#allocation9], 128, 128, 8
    $region17: #{tpu_custom_call.1} parent=1 // pred_fallthru
      _
    // Predicated region
    $region18: #{tpu_custom_call.1} parent=1 // pred_check
      _
    $region19: #{tpu_custom_call.1} parent=1 // pred_check_branch
      %77 = sbr.rel (0) target = $region21
    $region20: #{tpu_custom_call.1} parent=1 // pred_region
      %s79 = ssub.s32 32, 32
      %80 = vsyncadd [#allocation9], %s79
      %s82 = sshll.u32 [#allocation10], 4
      %s83 = int_to_ptr.vmem [resolvable:$true] %s82
      %85 = dma.hbm_to_vmem [thread:$0]  %s4, 32, %s83, [#allocation9]
    $region21: #{tpu_custom_call.1} parent=1 // pred_fallthru
      _
    // Predicated region
    $region22: #{tpu_custom_call.1} parent=1 // pred_check
      _
    $region23: #{tpu_custom_call.1} parent=1 // pred_check_branch
      %87 = sbr.rel (0) target = $region25
    $region24: #{tpu_custom_call.1} parent=1 // pred_region
      _
    $region25: #{tpu_custom_call.1} parent=1 // pred_fallthru
      _
    // Predicated region
    $region26: #{tpu_custom_call.1} parent=1 // pred_check
      _
    $region27: #{tpu_custom_call.1} parent=1 // pred_check_branch
      %89 = sbr.rel (0) target = $region29
    $region28: #{tpu_custom_call.1} parent=1 // pred_region
      _
    $region29: #{tpu_custom_call.1} parent=1 // pred_fallthru
      _
    // Predicated region
    $region30: #{tpu_custom_call.1} parent=1 // pred_check
      _
    $region31: #{tpu_custom_call.1} parent=1 // pred_check_branch
      %91 = sbr.rel (0) target = $region33
    $region32: #{tpu_custom_call.1} parent=1 // pred_region
      _
    $region33: #{tpu_custom_call.1} parent=1 // pred_fallthru
      _
    // Predicated region
    $region34: #{tpu_custom_call.1} parent=1 // pred_check
      _
    $region35: #{tpu_custom_call.1} parent=1 // pred_check_branch
      %93 = sbr.rel (0) target = $region37
    $region36: #{tpu_custom_call.1} parent=1 // pred_region
      %s95 = ssub.s32 16, 16
      %96 = vsyncadd [#allocation12], %s95
      %s98 = sshll.u32 [#allocation11], 4
      %s99 = int_to_ptr.vmem [resolvable:$true] %s98
      %101 = dma.hbm_to_vmem [thread:$0]  %s8, 16, %s99, [#allocation12]
    $region37: #{tpu_custom_call.1} parent=1 // pred_fallthru
      _
    // Predicated region
    $region38: #{tpu_custom_call.1} parent=1 // pred_check
      _
    $region39: #{tpu_custom_call.1} parent=1 // pred_check_branch
      %103 = sbr.rel (0) target = $region41
    $region40: #{tpu_custom_call.1} parent=1 // pred_region
      %s105 = ssub.s32 3200, 3200
      %106 = vsyncadd [#allocation12], %s105
      %s107 = sshll.u32 [#allocation13], 4
      %s108 = int_to_ptr.vmem [resolvable:$true] %s107
      %113 = dma.hbm_to_vmem [thread:$0]  %s9, 3200, %s108, [#allocation12], 128, 128, 8
    $region41: #{tpu_custom_call.1} parent=1 // pred_fallthru
      _
    // Predicated region
    $region42: #{tpu_custom_call.1} parent=1 // pred_check
      _
    $region43: #{tpu_custom_call.1} parent=1 // pred_check_branch
      %115 = sbr.rel (0) target = $region45
    $region44: #{tpu_custom_call.1} parent=1 // pred_region
      %s117 = ssub.s32 32, 32
      %118 = vsyncadd [#allocation15], %s117
      %s120 = sshll.u32 [#allocation14], 4
      %s121 = int_to_ptr.vmem [resolvable:$true] %s120
      %123 = dma.hbm_to_vmem [thread:$0]  %s10, 32, %s121, [#allocation15]
    $region45: #{tpu_custom_call.1} parent=1 // pred_fallthru
      _
    // Predicated region
    $region46: #{tpu_custom_call.1} parent=1 // pred_check
      _
    $region47: #{tpu_custom_call.1} parent=1 // pred_check_branch
      %125 = sbr.rel (0) target = $region49
    $region48: #{tpu_custom_call.1} parent=1 // pred_region
      _
    $region49: #{tpu_custom_call.1} parent=1 // pred_fallthru
      _
    // Predicated region
    $region50: #{tpu_custom_call.1} parent=1 // pred_check
      _
    $region51: #{tpu_custom_call.1} parent=1 // pred_check_branch
      %127 = sbr.rel (0) target = $region53
    $region52: #{tpu_custom_call.1} parent=1 // pred_region
      _
    $region53: #{tpu_custom_call.1} parent=1 // pred_fallthru
      _
    // Predicated region
    $region54: #{tpu_custom_call.1} parent=1 // pred_check
      _
    $region55: #{tpu_custom_call.1} parent=1 // pred_check_branch
      %129 = sbr.rel (0) target = $region57
    $region56: #{tpu_custom_call.1} parent=1 // pred_region
      _
    $region57: #{tpu_custom_call.1} parent=1 // pred_fallthru
      _
    // Predicated region
    $region58: #{tpu_custom_call.1} parent=1 // pred_check
      _
    $region59: #{tpu_custom_call.1} parent=1 // pred_check_branch
      %131 = sbr.rel (0) target = $region61
    $region60: #{tpu_custom_call.1} parent=1 // pred_region
      _
    $region61: #{tpu_custom_call.1} parent=1 // pred_fallthru
      _
    // Predicated region
    $region62: #{tpu_custom_call.1} parent=1 // pred_check
      _
    $region63: #{tpu_custom_call.1} parent=1 // pred_check_branch
      %133 = sbr.rel (0) target = $region65
    $region64: #{tpu_custom_call.1} parent=1 // pred_region
      %s135 = ssub.s32 896, 896
      %136 = vsyncadd [#allocation15], %s135
      %s137 = sshll.u32 [#allocation16], 4
      %s138 = int_to_ptr.vmem [resolvable:$true] %s137
      %143 = dma.hbm_to_vmem [thread:$0]  %s15, 896, %s138, [#allocation15], 128, 128, 8
    $region65: #{tpu_custom_call.1} parent=1 // pred_fallthru
      _
    // Predicated region
    $region66: #{tpu_custom_call.1} parent=1 // pred_check
      _
    $region67: #{tpu_custom_call.1} parent=1 // pred_check_branch
      %145 = sbr.rel (0) target = $region69
    $region68: #{tpu_custom_call.1} parent=1 // pred_region
      %s147 = ssub.s32 896, 896
      %148 = vsyncadd [#allocation18], %s147
      %s149 = sshll.u32 [#allocation17], 4
      %s150 = int_to_ptr.vmem [resolvable:$true] %s149
      %155 = dma.hbm_to_vmem [thread:$0]  %s16, 896, %s150, [#allocation18], 128, 128, 8
    $region69: #{tpu_custom_call.1} parent=1 // pred_fallthru
      _
    // Predicated region
    $region70: #{tpu_custom_call.1} parent=1 // pred_check
      _
    $region71: #{tpu_custom_call.1} parent=1 // pred_check_branch
      %157 = sbr.rel (0) target = $region73
    $region72: #{tpu_custom_call.1} parent=1 // pred_region
      %s159 = ssub.s32 1600, 1600
      %160 = vsyncadd [#allocation18], %s159
      %s161 = sshll.u32 [#allocation19], 4
      %s162 = int_to_ptr.vmem [resolvable:$true] %s161
      %167 = dma.hbm_to_vmem [thread:$0]  %s17, 1600, %s162, [#allocation18], 64, 64, 4
    $region73: #{tpu_custom_call.1} parent=1 // pred_fallthru
      _
    // Predicated region
    $region74: #{tpu_custom_call.1} parent=1 // pred_check
      _
    $region75: #{tpu_custom_call.1} parent=1 // pred_check_branch
      %169 = sbr.rel (0) target = $region77
    $region76: #{tpu_custom_call.1} parent=1 // pred_region
      _
    $region77: #{tpu_custom_call.1} parent=1 // pred_fallthru
      _
    // Predicated region
    $region78: #{tpu_custom_call.1} parent=1 // pred_check
      _
    $region79: #{tpu_custom_call.1} parent=1 // pred_check_branch
      %171 = sbr.rel (0) target = $region81
    $region80: #{tpu_custom_call.1} parent=1 // pred_region
      %s173 = ssub.s32 832, 832
      %174 = vsyncadd [#allocation21], %s173
      %s175 = sshll.u32 [#allocation20], 4
      %s176 = int_to_ptr.vmem [resolvable:$true] %s175
      %181 = dma.hbm_to_vmem [thread:$0]  %s19, 832, %s176, [#allocation21], 64, 64, 4
    $region81: #{tpu_custom_call.1} parent=1 // pred_fallthru
      _
    // Predicated region
    $region82: #{tpu_custom_call.1} parent=1 // pred_check
      _
    $region83: #{tpu_custom_call.1} parent=1 // pred_check_branch
      %183 = sbr.rel (0) target = $region85
    $region84: #{tpu_custom_call.1} parent=1 // pred_region
      _
    $region85: #{tpu_custom_call.1} parent=1 // pred_fallthru
      _
    // Predicated region
    $region86: #{tpu_custom_call.1} parent=1 // pred_check
      _
    $region87: #{tpu_custom_call.1} parent=1 // pred_check_branch
      %185 = sbr.rel (0) target = $region89
    $region88: #{tpu_custom_call.1} parent=1 // pred_region
      %186 = dma.done [#allocation3], 128
    $region89: #{tpu_custom_call.1} parent=1 // pred_fallthru
      _
    // Predicated region
    $region90: #{tpu_custom_call.1} parent=1 // pred_check
      _
    $region91: #{tpu_custom_call.1} parent=1 // pred_check_branch
      %188 = sbr.rel (0) target = $region93
    $region92: #{tpu_custom_call.1} parent=1 // pred_region
      %189 = dma.done [#allocation6], 128
    $region93: #{tpu_custom_call.1} parent=1 // pred_fallthru
      _
    // Predicated region
    $region94: #{tpu_custom_call.1} parent=1 // pred_check
      _
    $region95: #{tpu_custom_call.1} parent=1 // pred_check_branch
      %191 = sbr.rel (0) target = $region97
    $region96: #{tpu_custom_call.1} parent=1 // pred_region
      %192 = dma.done [#allocation6], 256
    $region97: #{tpu_custom_call.1} parent=1 // pred_fallthru
      _
    // Predicated region
    $region98: #{tpu_custom_call.1} parent=1 // pred_check
      _
    $region99: #{tpu_custom_call.1} parent=1 // pred_check_branch
      %194 = sbr.rel (0) target = $region101
    $region100: #{tpu_custom_call.1} parent=1 // pred_region
      %195 = dma.done [#allocation9], 3200
    $region101: #{tpu_custom_call.1} parent=1 // pred_fallthru
      _
    // Predicated region
    $region102: #{tpu_custom_call.1} parent=1 // pred_check
      _
    $region103: #{tpu_custom_call.1} parent=1 // pred_check_branch
      %197 = sbr.rel (0) target = $region105
    $region104: #{tpu_custom_call.1} parent=1 // pred_region
      %198 = dma.done [#allocation9], 32
    $region105: #{tpu_custom_call.1} parent=1 // pred_fallthru
      _
    // Predicated region
    $region106: #{tpu_custom_call.1} parent=1 // pred_check
      _
    $region107: #{tpu_custom_call.1} parent=1 // pred_check_branch
      %200 = sbr.rel (0) target = $region109
    $region108: #{tpu_custom_call.1} parent=1 // pred_region
      %201 = dma.done [#allocation12], 16
    $region109: #{tpu_custom_call.1} parent=1 // pred_fallthru
      _
    // Predicated region
    $region110: #{tpu_custom_call.1} parent=1 // pred_check
      _
    $region111: #{tpu_custom_call.1} parent=1 // pred_check_branch
      %203 = sbr.rel (0) target = $region113
    $region112: #{tpu_custom_call.1} parent=1 // pred_region
      %204 = dma.done [#allocation12], 3200
    $region113: #{tpu_custom_call.1} parent=1 // pred_fallthru
      _
    // Predicated region
    $region114: #{tpu_custom_call.1} parent=1 // pred_check
      _
    $region115: #{tpu_custom_call.1} parent=1 // pred_check_branch
      %206 = sbr.rel (0) target = $region117
    $region116: #{tpu_custom_call.1} parent=1 // pred_region
      %207 = dma.done [#allocation15], 32
    $region117: #{tpu_custom_call.1} parent=1 // pred_fallthru
      _
    // Predicated region
    $region118: #{tpu_custom_call.1} parent=1 // pred_check
      _
    $region119: #{tpu_custom_call.1} parent=1 // pred_check_branch
      %209 = sbr.rel (0) target = $region121
    $region120: #{tpu_custom_call.1} parent=1 // pred_region
      %210 = dma.done [#allocation15], 896
    $region121: #{tpu_custom_call.1} parent=1 // pred_fallthru
      _
    // Predicated region
    $region122: #{tpu_custom_call.1} parent=1 // pred_check
      _
    $region123: #{tpu_custom_call.1} parent=1 // pred_check_branch
      %212 = sbr.rel (0) target = $region125
    $region124: #{tpu_custom_call.1} parent=1 // pred_region
      %213 = dma.done [#allocation18], 896
    $region125: #{tpu_custom_call.1} parent=1 // pred_fallthru
      _
    // Predicated region
    $region126: #{tpu_custom_call.1} parent=1 // pred_check
      _
    $region127: #{tpu_custom_call.1} parent=1 // pred_check_branch
      %215 = sbr.rel (0) target = $region129
    $region128: #{tpu_custom_call.1} parent=1 // pred_region
      %216 = dma.done [#allocation18], 1600
    $region129: #{tpu_custom_call.1} parent=1 // pred_fallthru
      _
    // Predicated region
    $region130: #{tpu_custom_call.1} parent=1 // pred_check
      _
    $region131: #{tpu_custom_call.1} parent=1 // pred_check_branch
      %218 = sbr.rel (0) target = $region133
    $region132: #{tpu_custom_call.1} parent=1 // pred_region
      %219 = dma.done [#allocation21], 832
    $region133: #{tpu_custom_call.1} parent=1 // pred_fallthru
      _
    %v221 = vld [vmem:[#allocation2] sm:$0xff]
    %v222 = vld [vmem:[#allocation8] sm:$0xff]
    %v223 = vld [vmem:[#allocation8 + $0x8] sm:$0xff]
    %v224 = vld [vmem:[#allocation8 + $0x10] sm:$0xff]
    %v225 = vld [vmem:[#allocation8 + $0x18] sm:$0xff]
    %v226 = vld [vmem:[#allocation8 + $0x20] sm:$0xff]
    %v227 = vld [vmem:[#allocation8 + $0x28] sm:$0xff]
    %v228 = vld [vmem:[#allocation8 + $0x30] sm:$0xff]
    %v229 = vld [vmem:[#allocation8 + $0x38] sm:$0xff]
    %v230 = vld [vmem:[#allocation8 + $0x40] sm:$0xff]
    %v231 = vld [vmem:[#allocation8 + $0x48] sm:$0xff]
    %v232 = vld [vmem:[#allocation8 + $0x50] sm:$0xff]
    %v233 = vld [vmem:[#allocation8 + $0x58] sm:$0xff]
    %v234 = vld [vmem:[#allocation8 + $0x60] sm:$0xff]
    %v235 = vld [vmem:[#allocation8 + $0x68] sm:$0xff]
    %v236 = vld [vmem:[#allocation8 + $0x70] sm:$0xff]
    %v237 = vld [vmem:[#allocation8 + $0x78] sm:$0xff]
    %v238 = vld [vmem:[#allocation8 + $0x80] sm:$0xff]
    %v239 = vld [vmem:[#allocation8 + $0x88] sm:$0xff]
    %v240 = vld [vmem:[#allocation8 + $0x90] sm:$0xff]
    %v241 = vld [vmem:[#allocation8 + $0x98] sm:$0xff]
    %v242 = vld [vmem:[#allocation8 + $0xa0] sm:$0xff]
    %v243 = vld [vmem:[#allocation8 + $0xa8] sm:$0xff]
    %v244 = vld [vmem:[#allocation8 + $0xb0] sm:$0xff]
    %v245 = vld [vmem:[#allocation8 + $0xb8] sm:$0xff]
    %v246 = vld [vmem:[#allocation8 + $0xc0] sm:$0xff]
    %v247 = vld [vmem:[#allocation10] sm:$0x3]
    %v249 = vlaneseq
    %v250 = vshrl.u32 %v249, 7
    %v251 = vsub.s32 0, %v250
    %v252 = vrot.slane %v247, %v251
    %v253 = vlaneseq
    %v254 = vshrl.u32 %v253, 7
    %v255 = vsub.s32 1, %v254
    %v256 = vrot.slane %v247, %v255
    %v260 = vunpack.c.l.b16 %v221
    %v261 = vunpack.c.h.b16 %v221
    %v262 = vpack.c.b16 %v260, %v260
    %v263 = vpack.c.b16 %v261, %v261
    %v290 = vunpack.c.l.b16 %v222
    %v291 = vunpack.c.h.b16 %v222
    %v292 = vunpack.c.l.b16 %v223
    %v293 = vunpack.c.h.b16 %v223
    %v294 = vunpack.c.l.b16 %v224
    %v295 = vunpack.c.h.b16 %v224
    %v296 = vunpack.c.l.b16 %v225
    %v297 = vunpack.c.h.b16 %v225
    %v298 = vunpack.c.l.b16 %v226
    %v299 = vunpack.c.h.b16 %v226
    %v300 = vunpack.c.l.b16 %v227
    %v301 = vunpack.c.h.b16 %v227
    %v302 = vunpack.c.l.b16 %v228
    %v303 = vunpack.c.h.b16 %v228
    %v304 = vunpack.c.l.b16 %v229
    %v305 = vunpack.c.h.b16 %v229
    %v306 = vunpack.c.l.b16 %v230
    %v307 = vunpack.c.h.b16 %v230
    %v308 = vunpack.c.l.b16 %v231
    %v309 = vunpack.c.h.b16 %v231
    %v310 = vunpack.c.l.b16 %v232
    %v311 = vunpack.c.h.b16 %v232
    %v312 = vunpack.c.l.b16 %v233
    %v313 = vunpack.c.h.b16 %v233
    %v314 = vunpack.c.l.b16 %v234
    %v315 = vunpack.c.h.b16 %v234
    %v316 = vunpack.c.l.b16 %v235
    %v317 = vunpack.c.h.b16 %v235
    %v318 = vunpack.c.l.b16 %v236
    %v319 = vunpack.c.h.b16 %v236
    %v320 = vunpack.c.l.b16 %v237
    %v321 = vunpack.c.h.b16 %v237
    %v322 = vunpack.c.l.b16 %v238
    %v323 = vunpack.c.h.b16 %v238
    %v324 = vunpack.c.l.b16 %v239
    %v325 = vunpack.c.h.b16 %v239
    %v326 = vunpack.c.l.b16 %v240
    %v327 = vunpack.c.h.b16 %v240
    %v328 = vunpack.c.l.b16 %v241
    %v329 = vunpack.c.h.b16 %v241
    %v330 = vunpack.c.l.b16 %v242
    %v331 = vunpack.c.h.b16 %v242
    %v332 = vunpack.c.l.b16 %v243
    %v333 = vunpack.c.h.b16 %v243
    %v334 = vunpack.c.l.b16 %v244
    %v335 = vunpack.c.h.b16 %v244
    %v336 = vunpack.c.l.b16 %v245
    %v337 = vunpack.c.h.b16 %v245
    %v338 = vunpack.c.l.b16 %v246
    %v339 = vunpack.c.h.b16 %v246
    %v340 = vpack.c.b16 %v292, %v290
    %v341 = vpack.c.b16 %v293, %v291
    %v342 = vpack.c.b16 %v296, %v294
    %v343 = vpack.c.b16 %v297, %v295
    %v344 = vpack.c.b16 %v300, %v298
    %v345 = vpack.c.b16 %v301, %v299
    %v346 = vpack.c.b16 %v304, %v302
    %v347 = vpack.c.b16 %v305, %v303
    %v348 = vpack.c.b16 %v308, %v306
    %v349 = vpack.c.b16 %v309, %v307
    %v350 = vpack.c.b16 %v312, %v310
    %v351 = vpack.c.b16 %v313, %v311
    %v352 = vpack.c.b16 %v316, %v314
    %v353 = vpack.c.b16 %v317, %v315
    %v354 = vpack.c.b16 %v320, %v318
    %v355 = vpack.c.b16 %v321, %v319
    %v356 = vpack.c.b16 %v324, %v322
    %v357 = vpack.c.b16 %v325, %v323
    %v358 = vpack.c.b16 %v328, %v326
    %v359 = vpack.c.b16 %v329, %v327
    %v360 = vpack.c.b16 %v332, %v330
    %v361 = vpack.c.b16 %v333, %v331
    %v362 = vpack.c.b16 %v336, %v334
    %v363 = vpack.c.b16 %v337, %v335
    %v364 = vpack.c.b16 %v338, %v338
    %v365 = vpack.c.b16 %v339, %v339
    %vm390 = vcmask 588800
    %v392 = vsel %vm390, %v263, 0
    %vm394 = vcmask 1043456
    %v396 = vsel %vm394, %v364, 0
    %v399 = vsel %vm394, %v365, 0
    %401 = vmatprep.subr.bf16.mxu0 %v341
    %402 = vmatpush1.bf16.msra.mxu0 %v340
    %403 = vmatprep.subr.bf16.mxu0 %v343
    %404 = vmatpush1.bf16.msra.mxu0 %v342
    %405 = vmatprep.subr.bf16.mxu0 %v345
    %406 = vmatpush1.bf16.msra.mxu0 %v344
    %407 = vmatprep.subr.bf16.mxu0 %v347
    %408 = vmatpush1.bf16.msra.mxu0 %v346
    %409 = vmatprep.subr.bf16.mxu0 %v349
    %410 = vmatpush1.bf16.msra.mxu0 %v348
    %411 = vmatprep.subr.bf16.mxu0 %v351
    %412 = vmatpush1.bf16.msra.mxu0 %v350
    %413 = vmatprep.subr.bf16.mxu0 %v353
    %414 = vmatpush1.bf16.msra.mxu0 %v352
    %415 = vmatprep.subr.bf16.mxu0 %v355
    %416 = vmatpush1.bf16.msra.mxu0 %v354
    %417 = vmatprep.subr.bf16.mxu0 %v357
    %418 = vmatpush1.bf16.msra.mxu0 %v356
    %419 = vmatprep.subr.bf16.mxu0 %v359
    %420 = vmatpush1.bf16.msra.mxu0 %v358
    %421 = vmatprep.subr.bf16.mxu0 %v361
    %422 = vmatpush1.bf16.msra.mxu0 %v360
    %423 = vmatprep.subr.bf16.mxu0 %v363
    %424 = vmatpush1.bf16.msra.mxu0 %v362
    %425 = vmatprep.subr.bf16.mxu0 %v399
    %426 = vmatpush1.bf16.msra.mxu0 %v396
    %427 = vmatprep.subr.bf16.mxu0 0
    %428 = vmatpush1.bf16.msra.mxu0 0
    %429 = vmatprep.subr.bf16.mxu0 0
    %430 = vmatpush1.bf16.msra.mxu0 0
    %431 = vmatprep.subr.bf16.mxu0 0
    %432 = vmatpush1.bf16.msra.mxu0 0
    %433 = vmatprep.mubr.bf16.mxu0 %v392
    %434 = vmatmul.mubr.bf16.gmra.mrb[0].mxu0 %v262
    %v435 = vpop.f32.mrb[0].mxu0
    %v436 = vadd.f32 %v252, %v435
    %v437 = vpop.f32.mrb[0].mxu0
    %v438 = vadd.f32 %v256, %v437
    %v439 = vpop.f32.mrb[0].mxu0
    %v440 = vpop.f32.mrb[0].mxu0
    %441 = vdwg.mxu0
    %v442 = vmax.f32 %v436, 0.0
    %v443 = vmax.f32 %v438, 0.0
    %v444 = vpack.c.bf16 %v442, %v442
    %v445 = vpack.c.bf16 %v443, %v443
    %v446 = vld [vmem:[%s5] sm:$0xf]
    %v447 = vld [vmem:[%s5 + $0x4] sm:$0xf]
    %v448 = vld [vmem:[%s5 + $0x8] sm:$0xf]
    %v449 = vld [vmem:[%s5 + $0xc] sm:$0xf]
    %v450 = vld [vmem:[%s5 + $0x10] sm:$0xf]
    %v451 = vld [vmem:[%s5 + $0x14] sm:$0xf]
    %v452 = vld [vmem:[%s5 + $0x18] sm:$0xf]
    %v453 = vld [vmem:[%s5 + $0x1c] sm:$0xf]
    %v454 = vld [vmem:[%s5 + $0x20] sm:$0xf]
    %v455 = vld [vmem:[%s5 + $0x24] sm:$0xf]
    %v456 = vld [vmem:[%s5 + $0x28] sm:$0xf]
    %v457 = vld [vmem:[%s5 + $0x2c] sm:$0xf]
    %v458 = vld [vmem:[%s5 + $0x30] sm:$0xf]
    %v459 = vld [vmem:[%s5 + $0x34] sm:$0xf]
    %v460 = vld [vmem:[%s5 + $0x38] sm:$0xf]
    %v461 = vld [vmem:[%s5 + $0x3c] sm:$0xf]
    %v462 = vld [vmem:[%s5 + $0x40] sm:$0xf]
    %v463 = vld [vmem:[%s5 + $0x44] sm:$0xf]
    %v464 = vld [vmem:[%s5 + $0x48] sm:$0xf]
    %v465 = vld [vmem:[%s5 + $0x4c] sm:$0xf]
    %v466 = vld [vmem:[%s5 + $0x50] sm:$0xf]
    %v467 = vld [vmem:[%s5 + $0x54] sm:$0xf]
    %v468 = vld [vmem:[%s5 + $0x58] sm:$0xf]
    %v469 = vld [vmem:[%s5 + $0x5c] sm:$0xf]
    %v470 = vld [vmem:[%s5 + $0x60] sm:$0xf]
    %v471 = vld [vmem:[%s6] sm:$0x1]
    %v473 = vlaneseq
    %v474 = vshrl.u32 %v473, 7
    %v475 = vsub.s32 0, %v474
    %v476 = vrot.slane %v471, %v475
    %v503 = vunpack.c.l.b16 %v446
    %v504 = vunpack.c.l.b16 %v447
    %v505 = vunpack.c.l.b16 %v448
    %v506 = vunpack.c.l.b16 %v449
    %v507 = vunpack.c.l.b16 %v450
    %v508 = vunpack.c.l.b16 %v451
    %v509 = vunpack.c.l.b16 %v452
    %v510 = vunpack.c.l.b16 %v453
    %v511 = vunpack.c.l.b16 %v454
    %v512 = vunpack.c.l.b16 %v455
    %v513 = vunpack.c.l.b16 %v456
    %v514 = vunpack.c.l.b16 %v457
    %v515 = vunpack.c.l.b16 %v458
    %v516 = vunpack.c.l.b16 %v459
    %v517 = vunpack.c.l.b16 %v460
    %v518 = vunpack.c.l.b16 %v461
    %v519 = vunpack.c.l.b16 %v462
    %v520 = vunpack.c.l.b16 %v463
    %v521 = vunpack.c.l.b16 %v464
    %v522 = vunpack.c.l.b16 %v465
    %v523 = vunpack.c.l.b16 %v466
    %v524 = vunpack.c.l.b16 %v467
    %v525 = vunpack.c.l.b16 %v468
    %v526 = vunpack.c.l.b16 %v469
    %v527 = vunpack.c.l.b16 %v470
    %v528 = vpack.c.b16 %v504, %v503
    %v529 = vpack.c.b16 %v506, %v505
    %v530 = vpack.c.b16 %v508, %v507
    %v531 = vpack.c.b16 %v510, %v509
    %v532 = vpack.c.b16 %v512, %v511
    %v533 = vpack.c.b16 %v514, %v513
    %v534 = vpack.c.b16 %v516, %v515
    %v535 = vpack.c.b16 %v518, %v517
    %v536 = vpack.c.b16 %v520, %v519
    %v537 = vpack.c.b16 %v522, %v521
    %v538 = vpack.c.b16 %v524, %v523
    %v539 = vpack.c.b16 %v526, %v525
    %v540 = vpack.c.b16 %v527, %v527
    %v554 = vsel %vm390, %v445, 0
    %v557 = vsel %vm394, %v540, 0
    %559 = vmatprep.subr.bf16.mxu0 0
    %560 = vmatpush1.bf16.msra.mxu0 %v528
    %561 = vmatprep.subr.bf16.mxu0 0
    %562 = vmatpush1.bf16.msra.mxu0 %v529
    %563 = vmatprep.subr.bf16.mxu0 0
    %564 = vmatpush1.bf16.msra.mxu0 %v530
    %565 = vmatprep.subr.bf16.mxu0 0
    %566 = vmatpush1.bf16.msra.mxu0 %v531
    %567 = vmatprep.subr.bf16.mxu0 0
    %568 = vmatpush1.bf16.msra.mxu0 %v532
    %569 = vmatprep.subr.bf16.mxu0 0
    %570 = vmatpush1.bf16.msra.mxu0 %v533
    %571 = vmatprep.subr.bf16.mxu0 0
    %572 = vmatpush1.bf16.msra.mxu0 %v534
    %573 = vmatprep.subr.bf16.mxu0 0
    %574 = vmatpush1.bf16.msra.mxu0 %v535
    %575 = vmatprep.subr.bf16.mxu0 0
    %576 = vmatpush1.bf16.msra.mxu0 %v536
    %577 = vmatprep.subr.bf16.mxu0 0
    %578 = vmatpush1.bf16.msra.mxu0 %v537
    %579 = vmatprep.subr.bf16.mxu0 0
    %580 = vmatpush1.bf16.msra.mxu0 %v538
    %581 = vmatprep.subr.bf16.mxu0 0
    %582 = vmatpush1.bf16.msra.mxu0 %v539
    %583 = vmatprep.subr.bf16.mxu0 0
    %584 = vmatpush1.bf16.msra.mxu0 %v557
    %585 = vmatprep.subr.bf16.mxu0 0
    %586 = vmatpush1.bf16.msra.mxu0 0
    %587 = vmatprep.subr.bf16.mxu0 0
    %588 = vmatpush1.bf16.msra.mxu0 0
    %589 = vmatprep.subr.bf16.mxu0 0
    %590 = vmatpush1.bf16.msra.mxu0 0
    %591 = vmatprep.mubr.bf16.mxu0 %v554
    %592 = vmatmul.mubr.bf16.gmra.mrb[0].mxu0 %v444
    %v593 = vpop.f32.mrb[0].mxu0
    %v594 = vadd.f32 %v476, %v593
    %v595 = vpop.f32.mrb[0].mxu0
    %v596 = vpop.f32.mrb[0].mxu0
    %v597 = vpop.f32.mrb[0].mxu0
    %598 = vdwg.mxu0
    %v599 = vmax.f32 %v594, 0.0
    %v600 = vpack.c.bf16 %v599, %v599
    %v601 = vld [vmem:[%s7] sm:$0xf]
    %v602 = vld [vmem:[%s7 + $0x4] sm:$0xf]
    %v603 = vld [vmem:[%s7 + $0x8] sm:$0xf]
    %v604 = vld [vmem:[%s7 + $0xc] sm:$0xf]
    %v605 = vld [vmem:[%s7 + $0x10] sm:$0xf]
    %v606 = vld [vmem:[%s7 + $0x14] sm:$0xf]
    %v607 = vld [vmem:[%s7 + $0x18] sm:$0xf]
    %v608 = vld [vmem:[%s7 + $0x1c] sm:$0xf]
    %v609 = vld [vmem:[%s7 + $0x20] sm:$0xf]
    %v610 = vld [vmem:[%s7 + $0x24] sm:$0xf]
    %v611 = vld [vmem:[%s7 + $0x28] sm:$0xf]
    %v612 = vld [vmem:[%s7 + $0x2c] sm:$0xf]
    %v613 = vld [vmem:[%s7 + $0x30] sm:$0x3]
    %v614 = vld [vmem:[#allocation11] sm:$0x1]
    %v616 = vlaneseq
    %v617 = vshrl.u32 %v616, 7
    %v618 = vsub.s32 0, %v617
    %v619 = vrot.slane %v614, %v618
    %v634 = vunpack.c.l.b16 %v601
    %v635 = vunpack.c.l.b16 %v602
    %v636 = vunpack.c.l.b16 %v603
    %v637 = vunpack.c.l.b16 %v604
    %v638 = vunpack.c.l.b16 %v605
    %v639 = vunpack.c.l.b16 %v606
    %v640 = vunpack.c.l.b16 %v607
    %v641 = vunpack.c.l.b16 %v608
    %v642 = vunpack.c.l.b16 %v609
    %v643 = vunpack.c.l.b16 %v610
    %v644 = vunpack.c.l.b16 %v611
    %v645 = vunpack.c.l.b16 %v612
    %v646 = vunpack.c.l.b16 %v613
    %v647 = vpack.c.b16 %v635, %v634
    %v648 = vpack.c.b16 %v637, %v636
    %v649 = vpack.c.b16 %v639, %v638
    %v650 = vpack.c.b16 %v641, %v640
    %v651 = vpack.c.b16 %v643, %v642
    %v652 = vpack.c.b16 %v645, %v644
    %v653 = vpack.c.b16 %v646, %v646
    %vm660 = vcmask 818176
    %v662 = vsel %vm660, %v600, 0
    %vm664 = vcmask 1041408
    %v666 = vsel %vm664, %v653, 0
    %668 = vmatprep.subr.bf16.mxu0 0
    %669 = vmatpush1.bf16.msra.mxu0 %v647
    %670 = vmatprep.subr.bf16.mxu0 0
    %671 = vmatpush1.bf16.msra.mxu0 %v648
    %672 = vmatprep.subr.bf16.mxu0 0
    %673 = vmatpush1.bf16.msra.mxu0 %v649
    %674 = vmatprep.subr.bf16.mxu0 0
    %675 = vmatpush1.bf16.msra.mxu0 %v650
    %676 = vmatprep.subr.bf16.mxu0 0
    %677 = vmatpush1.bf16.msra.mxu0 %v651
    %678 = vmatprep.subr.bf16.mxu0 0
    %679 = vmatpush1.bf16.msra.mxu0 %v652
    %680 = vmatprep.subr.bf16.mxu0 0
    %681 = vmatpush1.bf16.msra.mxu0 %v666
    %682 = vmatprep.subr.bf16.mxu0 0
    %683 = vmatpush1.bf16.msra.mxu0 0
    %684 = vmatprep.subr.bf16.mxu0 0
    %685 = vmatpush1.bf16.msra.mxu0 0
    %686 = vmatprep.subr.bf16.mxu0 0
    %687 = vmatpush1.bf16.msra.mxu0 0
    %688 = vmatprep.subr.bf16.mxu0 0
    %689 = vmatpush1.bf16.msra.mxu0 0
    %690 = vmatprep.subr.bf16.mxu0 0
    %691 = vmatpush1.bf16.msra.mxu0 0
    %692 = vmatprep.subr.bf16.mxu0 0
    %693 = vmatpush1.bf16.msra.mxu0 0
    %694 = vmatprep.subr.bf16.mxu0 0
    %695 = vmatpush1.bf16.msra.mxu0 0
    %696 = vmatprep.subr.bf16.mxu0 0
    %697 = vmatpush1.bf16.msra.mxu0 0
    %698 = vmatprep.subr.bf16.mxu0 0
    %699 = vmatpush1.bf16.msra.mxu0 0
    %700 = vmatprep.mubr.bf16.mxu0 0
    %701 = vmatmul.mubr.bf16.gmra.mrb[0].mxu0 %v662
    %v702 = vpop.f32.mrb[0].mxu0
    %v703 = vadd.f32 %v619, %v702
    %v704 = vpop.f32.mrb[0].mxu0
    %v705 = vpop.f32.mrb[0].mxu0
    %v706 = vpop.f32.mrb[0].mxu0
    %707 = vdwg.mxu0
    %v708 = vmax.f32 %v703, 0.0
    %v709 = vpack.c.bf16 %v708, %v708
    %v710 = vld [vmem:[#allocation5] sm:$0xff]
    %v711 = vld [vmem:[#allocation13] sm:$0xff]
    %v712 = vld [vmem:[#allocation13 + $0x8] sm:$0xff]
    %v713 = vld [vmem:[#allocation13 + $0x10] sm:$0xff]
    %v714 = vld [vmem:[#allocation13 + $0x18] sm:$0xff]
    %v715 = vld [vmem:[#allocation13 + $0x20] sm:$0xff]
    %v716 = vld [vmem:[#allocation13 + $0x28] sm:$0xff]
    %v717 = vld [vmem:[#allocation13 + $0x30] sm:$0xff]
    %v718 = vld [vmem:[#allocation13 + $0x38] sm:$0xff]
    %v719 = vld [vmem:[#allocation13 + $0x40] sm:$0xff]
    %v720 = vld [vmem:[#allocation13 + $0x48] sm:$0xff]
    %v721 = vld [vmem:[#allocation13 + $0x50] sm:$0xff]
    %v722 = vld [vmem:[#allocation13 + $0x58] sm:$0xff]
    %v723 = vld [vmem:[#allocation13 + $0x60] sm:$0xff]
    %v724 = vld [vmem:[#allocation13 + $0x68] sm:$0xff]
    %v725 = vld [vmem:[#allocation13 + $0x70] sm:$0xff]
    %v726 = vld [vmem:[#allocation13 + $0x78] sm:$0xff]
    %v727 = vld [vmem:[#allocation13 + $0x80] sm:$0xff]
    %v728 = vld [vmem:[#allocation13 + $0x88] sm:$0xff]
    %v729 = vld [vmem:[#allocation13 + $0x90] sm:$0xff]
    %v730 = vld [vmem:[#allocation13 + $0x98] sm:$0xff]
    %v731 = vld [vmem:[#allocation13 + $0xa0] sm:$0xff]
    %v732 = vld [vmem:[#allocation13 + $0xa8] sm:$0xff]
    %v733 = vld [vmem:[#allocation13 + $0xb0] sm:$0xff]
    %v734 = vld [vmem:[#allocation13 + $0xb8] sm:$0xff]
    %v735 = vld [vmem:[#allocation13 + $0xc0] sm:$0xff]
    %v736 = vld [vmem:[#allocation14] sm:$0x3]
    %v738 = vlaneseq
    %v739 = vshrl.u32 %v738, 7
    %v740 = vsub.s32 0, %v739
    %v741 = vrot.slane %v736, %v740
    %v742 = vlaneseq
    %v743 = vshrl.u32 %v742, 7
    %v744 = vsub.s32 1, %v743
    %v745 = vrot.slane %v736, %v744
    %v749 = vunpack.c.l.b16 %v710
    %v750 = vunpack.c.h.b16 %v710
    %v751 = vpack.c.b16 %v749, %v749
    %v752 = vpack.c.b16 %v750, %v750
    %v779 = vunpack.c.l.b16 %v711
    %v780 = vunpack.c.h.b16 %v711
    %v781 = vunpack.c.l.b16 %v712
    %v782 = vunpack.c.h.b16 %v712
    %v783 = vunpack.c.l.b16 %v713
    %v784 = vunpack.c.h.b16 %v713
    %v785 = vunpack.c.l.b16 %v714
    %v786 = vunpack.c.h.b16 %v714
    %v787 = vunpack.c.l.b16 %v715
    %v788 = vunpack.c.h.b16 %v715
    %v789 = vunpack.c.l.b16 %v716
    %v790 = vunpack.c.h.b16 %v716
    %v791 = vunpack.c.l.b16 %v717
    %v792 = vunpack.c.h.b16 %v717
    %v793 = vunpack.c.l.b16 %v718
    %v794 = vunpack.c.h.b16 %v718
    %v795 = vunpack.c.l.b16 %v719
    %v796 = vunpack.c.h.b16 %v719
    %v797 = vunpack.c.l.b16 %v720
    %v798 = vunpack.c.h.b16 %v720
    %v799 = vunpack.c.l.b16 %v721
    %v800 = vunpack.c.h.b16 %v721
    %v801 = vunpack.c.l.b16 %v722
    %v802 = vunpack.c.h.b16 %v722
    %v803 = vunpack.c.l.b16 %v723
    %v804 = vunpack.c.h.b16 %v723
    %v805 = vunpack.c.l.b16 %v724
    %v806 = vunpack.c.h.b16 %v724
    %v807 = vunpack.c.l.b16 %v725
    %v808 = vunpack.c.h.b16 %v725
    %v809 = vunpack.c.l.b16 %v726
    %v810 = vunpack.c.h.b16 %v726
    %v811 = vunpack.c.l.b16 %v727
    %v812 = vunpack.c.h.b16 %v727
    %v813 = vunpack.c.l.b16 %v728
    %v814 = vunpack.c.h.b16 %v728
    %v815 = vunpack.c.l.b16 %v729
    %v816 = vunpack.c.h.b16 %v729
    %v817 = vunpack.c.l.b16 %v730
    %v818 = vunpack.c.h.b16 %v730
    %v819 = vunpack.c.l.b16 %v731
    %v820 = vunpack.c.h.b16 %v731
    %v821 = vunpack.c.l.b16 %v732
    %v822 = vunpack.c.h.b16 %v732
    %v823 = vunpack.c.l.b16 %v733
    %v824 = vunpack.c.h.b16 %v733
    %v825 = vunpack.c.l.b16 %v734
    %v826 = vunpack.c.h.b16 %v734
    %v827 = vunpack.c.l.b16 %v735
    %v828 = vunpack.c.h.b16 %v735
    %v829 = vpack.c.b16 %v781, %v779
    %v830 = vpack.c.b16 %v782, %v780
    %v831 = vpack.c.b16 %v785, %v783
    %v832 = vpack.c.b16 %v786, %v784
    %v833 = vpack.c.b16 %v789, %v787
    %v834 = vpack.c.b16 %v790, %v788
    %v835 = vpack.c.b16 %v793, %v791
    %v836 = vpack.c.b16 %v794, %v792
    %v837 = vpack.c.b16 %v797, %v795
    %v838 = vpack.c.b16 %v798, %v796
    %v839 = vpack.c.b16 %v801, %v799
    %v840 = vpack.c.b16 %v802, %v800
    %v841 = vpack.c.b16 %v805, %v803
    %v842 = vpack.c.b16 %v806, %v804
    %v843 = vpack.c.b16 %v809, %v807
    %v844 = vpack.c.b16 %v810, %v808
    %v845 = vpack.c.b16 %v813, %v811
    %v846 = vpack.c.b16 %v814, %v812
    %v847 = vpack.c.b16 %v817, %v815
    %v848 = vpack.c.b16 %v818, %v816
    %v849 = vpack.c.b16 %v821, %v819
    %v850 = vpack.c.b16 %v822, %v820
    %v851 = vpack.c.b16 %v825, %v823
    %v852 = vpack.c.b16 %v826, %v824
    %v853 = vpack.c.b16 %v827, %v827
    %v854 = vpack.c.b16 %v828, %v828
    %v880 = vsel %vm390, %v752, 0
    %v883 = vsel %vm394, %v853, 0
    %v886 = vsel %vm394, %v854, 0
    %888 = vmatprep.subr.bf16.mxu0 %v830
    %889 = vmatpush1.bf16.msra.mxu0 %v829
    %890 = vmatprep.subr.bf16.mxu0 %v832
    %891 = vmatpush1.bf16.msra.mxu0 %v831
    %892 = vmatprep.subr.bf16.mxu0 %v834
    %893 = vmatpush1.bf16.msra.mxu0 %v833
    %894 = vmatprep.subr.bf16.mxu0 %v836
    %895 = vmatpush1.bf16.msra.mxu0 %v835
    %896 = vmatprep.subr.bf16.mxu0 %v838
    %897 = vmatpush1.bf16.msra.mxu0 %v837
    %898 = vmatprep.subr.bf16.mxu0 %v840
    %899 = vmatpush1.bf16.msra.mxu0 %v839
    %900 = vmatprep.subr.bf16.mxu0 %v842
    %901 = vmatpush1.bf16.msra.mxu0 %v841
    %902 = vmatprep.subr.bf16.mxu0 %v844
    %903 = vmatpush1.bf16.msra.mxu0 %v843
    %904 = vmatprep.subr.bf16.mxu0 %v846
    %905 = vmatpush1.bf16.msra.mxu0 %v845
    %906 = vmatprep.subr.bf16.mxu0 %v848
    %907 = vmatpush1.bf16.msra.mxu0 %v847
    %908 = vmatprep.subr.bf16.mxu0 %v850
    %909 = vmatpush1.bf16.msra.mxu0 %v849
    %910 = vmatprep.subr.bf16.mxu0 %v852
    %911 = vmatpush1.bf16.msra.mxu0 %v851
    %912 = vmatprep.subr.bf16.mxu0 %v886
    %913 = vmatpush1.bf16.msra.mxu0 %v883
    %914 = vmatprep.subr.bf16.mxu0 0
    %915 = vmatpush1.bf16.msra.mxu0 0
    %916 = vmatprep.subr.bf16.mxu0 0
    %917 = vmatpush1.bf16.msra.mxu0 0
    %918 = vmatprep.subr.bf16.mxu0 0
    %919 = vmatpush1.bf16.msra.mxu0 0
    %920 = vmatprep.mubr.bf16.mxu0 %v880
    %921 = vmatmul.mubr.bf16.gmra.mrb[0].mxu0 %v751
    %v922 = vpop.f32.mrb[0].mxu0
    %v923 = vadd.f32 %v741, %v922
    %v924 = vpop.f32.mrb[0].mxu0
    %v925 = vadd.f32 %v745, %v924
    %v926 = vpop.f32.mrb[0].mxu0
    %v927 = vpop.f32.mrb[0].mxu0
    %928 = vdwg.mxu0
    %v929 = vmax.f32 %v923, 0.0
    %v930 = vmax.f32 %v925, 0.0
    %v931 = vpack.c.bf16 %v929, %v929
    %v932 = vpack.c.bf16 %v930, %v930
    %v933 = vld [vmem:[%s11] sm:$0xf]
    %v934 = vld [vmem:[%s11 + $0x4] sm:$0xf]
    %v935 = vld [vmem:[%s11 + $0x8] sm:$0xf]
    %v936 = vld [vmem:[%s11 + $0xc] sm:$0xf]
    %v937 = vld [vmem:[%s11 + $0x10] sm:$0xf]
    %v938 = vld [vmem:[%s11 + $0x14] sm:$0xf]
    %v939 = vld [vmem:[%s11 + $0x18] sm:$0xf]
    %v940 = vld [vmem:[%s11 + $0x1c] sm:$0xf]
    %v941 = vld [vmem:[%s11 + $0x20] sm:$0xf]
    %v942 = vld [vmem:[%s11 + $0x24] sm:$0xf]
    %v943 = vld [vmem:[%s11 + $0x28] sm:$0xf]
    %v944 = vld [vmem:[%s11 + $0x2c] sm:$0xf]
    %v945 = vld [vmem:[%s11 + $0x30] sm:$0xf]
    %v946 = vld [vmem:[%s11 + $0x34] sm:$0xf]
    %v947 = vld [vmem:[%s11 + $0x38] sm:$0xf]
    %v948 = vld [vmem:[%s11 + $0x3c] sm:$0xf]
    %v949 = vld [vmem:[%s11 + $0x40] sm:$0xf]
    %v950 = vld [vmem:[%s11 + $0x44] sm:$0xf]
    %v951 = vld [vmem:[%s11 + $0x48] sm:$0xf]
    %v952 = vld [vmem:[%s11 + $0x4c] sm:$0xf]
    %v953 = vld [vmem:[%s11 + $0x50] sm:$0xf]
    %v954 = vld [vmem:[%s11 + $0x54] sm:$0xf]
    %v955 = vld [vmem:[%s11 + $0x58] sm:$0xf]
    %v956 = vld [vmem:[%s11 + $0x5c] sm:$0xf]
    %v957 = vld [vmem:[%s11 + $0x60] sm:$0xf]
    %v958 = vld [vmem:[%s12] sm:$0x1]
    %v960 = vlaneseq
    %v961 = vshrl.u32 %v960, 7
    %v962 = vsub.s32 0, %v961
    %v963 = vrot.slane %v958, %v962
    %v990 = vunpack.c.l.b16 %v933
    %v991 = vunpack.c.l.b16 %v934
    %v992 = vunpack.c.l.b16 %v935
    %v993 = vunpack.c.l.b16 %v936
    %v994 = vunpack.c.l.b16 %v937
    %v995 = vunpack.c.l.b16 %v938
    %v996 = vunpack.c.l.b16 %v939
    %v997 = vunpack.c.l.b16 %v940
    %v998 = vunpack.c.l.b16 %v941
    %v999 = vunpack.c.l.b16 %v942
    %v1000 = vunpack.c.l.b16 %v943
    %v1001 = vunpack.c.l.b16 %v944
    %v1002 = vunpack.c.l.b16 %v945
    %v1003 = vunpack.c.l.b16 %v946
    %v1004 = vunpack.c.l.b16 %v947
    %v1005 = vunpack.c.l.b16 %v948
    %v1006 = vunpack.c.l.b16 %v949
    %v1007 = vunpack.c.l.b16 %v950
    %v1008 = vunpack.c.l.b16 %v951
    %v1009 = vunpack.c.l.b16 %v952
    %v1010 = vunpack.c.l.b16 %v953
    %v1011 = vunpack.c.l.b16 %v954
    %v1012 = vunpack.c.l.b16 %v955
    %v1013 = vunpack.c.l.b16 %v956
    %v1014 = vunpack.c.l.b16 %v957
    %v1015 = vpack.c.b16 %v991, %v990
    %v1016 = vpack.c.b16 %v993, %v992
    %v1017 = vpack.c.b16 %v995, %v994
    %v1018 = vpack.c.b16 %v997, %v996
    %v1019 = vpack.c.b16 %v999, %v998
    %v1020 = vpack.c.b16 %v1001, %v1000
    %v1021 = vpack.c.b16 %v1003, %v1002
    %v1022 = vpack.c.b16 %v1005, %v1004
    %v1023 = vpack.c.b16 %v1007, %v1006
    %v1024 = vpack.c.b16 %v1009, %v1008
    %v1025 = vpack.c.b16 %v1011, %v1010
    %v1026 = vpack.c.b16 %v1013, %v1012
    %v1027 = vpack.c.b16 %v1014, %v1014
    %v1041 = vsel %vm390, %v932, 0
    %v1044 = vsel %vm394, %v1027, 0
    %1046 = vmatprep.subr.bf16.mxu0 0
    %1047 = vmatpush1.bf16.msra.mxu0 %v1015
    %1048 = vmatprep.subr.bf16.mxu0 0
    %1049 = vmatpush1.bf16.msra.mxu0 %v1016
    %1050 = vmatprep.subr.bf16.mxu0 0
    %1051 = vmatpush1.bf16.msra.mxu0 %v1017
    %1052 = vmatprep.subr.bf16.mxu0 0
    %1053 = vmatpush1.bf16.msra.mxu0 %v1018
    %1054 = vmatprep.subr.bf16.mxu0 0
    %1055 = vmatpush1.bf16.msra.mxu0 %v1019
    %1056 = vmatprep.subr.bf16.mxu0 0
    %1057 = vmatpush1.bf16.msra.mxu0 %v1020
    %1058 = vmatprep.subr.bf16.mxu0 0
    %1059 = vmatpush1.bf16.msra.mxu0 %v1021
    %1060 = vmatprep.subr.bf16.mxu0 0
    %1061 = vmatpush1.bf16.msra.mxu0 %v1022
    %1062 = vmatprep.subr.bf16.mxu0 0
    %1063 = vmatpush1.bf16.msra.mxu0 %v1023
    %1064 = vmatprep.subr.bf16.mxu0 0
    %1065 = vmatpush1.bf16.msra.mxu0 %v1024
    %1066 = vmatprep.subr.bf16.mxu0 0
    %1067 = vmatpush1.bf16.msra.mxu0 %v1025
    %1068 = vmatprep.subr.bf16.mxu0 0
    %1069 = vmatpush1.bf16.msra.mxu0 %v1026
    %1070 = vmatprep.subr.bf16.mxu0 0
    %1071 = vmatpush1.bf16.msra.mxu0 %v1044
    %1072 = vmatprep.subr.bf16.mxu0 0
    %1073 = vmatpush1.bf16.msra.mxu0 0
    %1074 = vmatprep.subr.bf16.mxu0 0
    %1075 = vmatpush1.bf16.msra.mxu0 0
    %1076 = vmatprep.subr.bf16.mxu0 0
    %1077 = vmatpush1.bf16.msra.mxu0 0
    %1078 = vmatprep.mubr.bf16.mxu0 %v1041
    %1079 = vmatmul.mubr.bf16.gmra.mrb[0].mxu0 %v931
    %v1080 = vpop.f32.mrb[0].mxu0
    %v1081 = vadd.f32 %v963, %v1080
    %v1082 = vpop.f32.mrb[0].mxu0
    %v1083 = vpop.f32.mrb[0].mxu0
    %v1084 = vpop.f32.mrb[0].mxu0
    %1085 = vdwg.mxu0
    %v1086 = vmax.f32 %v1081, 0.0
    %v1087 = vpack.c.bf16 %v1086, %v1086
    %v1088 = vld [vmem:[%s13] sm:$0xf]
    %v1089 = vld [vmem:[%s13 + $0x4] sm:$0xf]
    %v1090 = vld [vmem:[%s13 + $0x8] sm:$0xf]
    %v1091 = vld [vmem:[%s13 + $0xc] sm:$0xf]
    %v1092 = vld [vmem:[%s13 + $0x10] sm:$0xf]
    %v1093 = vld [vmem:[%s13 + $0x14] sm:$0xf]
    %v1094 = vld [vmem:[%s13 + $0x18] sm:$0xf]
    %v1095 = vld [vmem:[%s13 + $0x1c] sm:$0xf]
    %v1096 = vld [vmem:[%s13 + $0x20] sm:$0xf]
    %v1097 = vld [vmem:[%s13 + $0x24] sm:$0xf]
    %v1098 = vld [vmem:[%s13 + $0x28] sm:$0xf]
    %v1099 = vld [vmem:[%s13 + $0x2c] sm:$0xf]
    %v1100 = vld [vmem:[%s13 + $0x30] sm:$0x3]
    %v1101 = vld [vmem:[%s14] sm:$0x1]
    %v1103 = vlaneseq
    %v1104 = vshrl.u32 %v1103, 7
    %v1105 = vsub.s32 0, %v1104
    %v1106 = vrot.slane %v1101, %v1105
    %v1121 = vunpack.c.l.b16 %v1088
    %v1122 = vunpack.c.l.b16 %v1089
    %v1123 = vunpack.c.l.b16 %v1090
    %v1124 = vunpack.c.l.b16 %v1091
    %v1125 = vunpack.c.l.b16 %v1092
    %v1126 = vunpack.c.l.b16 %v1093
    %v1127 = vunpack.c.l.b16 %v1094
    %v1128 = vunpack.c.l.b16 %v1095
    %v1129 = vunpack.c.l.b16 %v1096
    %v1130 = vunpack.c.l.b16 %v1097
    %v1131 = vunpack.c.l.b16 %v1098
    %v1132 = vunpack.c.l.b16 %v1099
    %v1133 = vunpack.c.l.b16 %v1100
    %v1134 = vpack.c.b16 %v1122, %v1121
    %v1135 = vpack.c.b16 %v1124, %v1123
    %v1136 = vpack.c.b16 %v1126, %v1125
    %v1137 = vpack.c.b16 %v1128, %v1127
    %v1138 = vpack.c.b16 %v1130, %v1129
    %v1139 = vpack.c.b16 %v1132, %v1131
    %v1140 = vpack.c.b16 %v1133, %v1133
    %v1148 = vsel %vm660, %v1087, 0
    %v1151 = vsel %vm664, %v1140, 0
    %1153 = vmatprep.subr.bf16.mxu0 0
    %1154 = vmatpush1.bf16.msra.mxu0 %v1134
    %1155 = vmatprep.subr.bf16.mxu0 0
    %1156 = vmatpush1.bf16.msra.mxu0 %v1135
    %1157 = vmatprep.subr.bf16.mxu0 0
    %1158 = vmatpush1.bf16.msra.mxu0 %v1136
    %1159 = vmatprep.subr.bf16.mxu0 0
    %1160 = vmatpush1.bf16.msra.mxu0 %v1137
    %1161 = vmatprep.subr.bf16.mxu0 0
    %1162 = vmatpush1.bf16.msra.mxu0 %v1138
    %1163 = vmatprep.subr.bf16.mxu0 0
    %1164 = vmatpush1.bf16.msra.mxu0 %v1139
    %1165 = vmatprep.subr.bf16.mxu0 0
    %1166 = vmatpush1.bf16.msra.mxu0 %v1151
    %1167 = vmatprep.subr.bf16.mxu0 0
    %1168 = vmatpush1.bf16.msra.mxu0 0
    %1169 = vmatprep.subr.bf16.mxu0 0
    %1170 = vmatpush1.bf16.msra.mxu0 0
    %1171 = vmatprep.subr.bf16.mxu0 0
    %1172 = vmatpush1.bf16.msra.mxu0 0
    %1173 = vmatprep.subr.bf16.mxu0 0
    %1174 = vmatpush1.bf16.msra.mxu0 0
    %1175 = vmatprep.subr.bf16.mxu0 0
    %1176 = vmatpush1.bf16.msra.mxu0 0
    %1177 = vmatprep.subr.bf16.mxu0 0
    %1178 = vmatpush1.bf16.msra.mxu0 0
    %1179 = vmatprep.subr.bf16.mxu0 0
    %1180 = vmatpush1.bf16.msra.mxu0 0
    %1181 = vmatprep.subr.bf16.mxu0 0
    %1182 = vmatpush1.bf16.msra.mxu0 0
    %1183 = vmatprep.subr.bf16.mxu0 0
    %1184 = vmatpush1.bf16.msra.mxu0 0
    %1185 = vmatprep.mubr.bf16.mxu0 0
    %1186 = vmatmul.mubr.bf16.gmra.mrb[0].mxu0 %v1148
    %v1187 = vpop.f32.mrb[0].mxu0
    %v1188 = vadd.f32 %v1106, %v1187
    %v1189 = vpop.f32.mrb[0].mxu0
    %v1190 = vpop.f32.mrb[0].mxu0
    %v1191 = vpop.f32.mrb[0].mxu0
    %1192 = vdwg.mxu0
    %v1193 = vmax.f32 %v1188, 0.0
    %v1194 = vpack.c.bf16 %v1193, %v1193
    %v1195 = vld [vmem:[#allocation16] sm:$0xff]
    %v1196 = vld [vmem:[#allocation16 + $0x8] sm:$0xff]
    %v1197 = vld [vmem:[#allocation16 + $0x10] sm:$0xff]
    %v1198 = vld [vmem:[#allocation16 + $0x18] sm:$0xff]
    %v1199 = vld [vmem:[#allocation16 + $0x20] sm:$0xff]
    %v1200 = vld [vmem:[#allocation16 + $0x28] sm:$0xff]
    %v1201 = vld [vmem:[#allocation16 + $0x30] sm:$0x11]
    %v1202 = vld [vmem:[#allocation17] sm:$0xff]
    %v1203 = vld [vmem:[#allocation17 + $0x8] sm:$0xff]
    %v1204 = vld [vmem:[#allocation17 + $0x10] sm:$0xff]
    %v1205 = vld [vmem:[#allocation17 + $0x18] sm:$0xff]
    %v1206 = vld [vmem:[#allocation17 + $0x20] sm:$0xff]
    %v1207 = vld [vmem:[#allocation17 + $0x28] sm:$0xff]
    %v1208 = vld [vmem:[#allocation17 + $0x30] sm:$0x11]
    %v1216 = vunpack.c.l.b16 %v1202
    %v1217 = vunpack.c.h.b16 %v1202
    %v1218 = vunpack.c.l.b16 %v1203
    %v1219 = vunpack.c.h.b16 %v1203
    %v1220 = vunpack.c.l.b16 %v1204
    %v1221 = vunpack.c.h.b16 %v1204
    %v1222 = vunpack.c.l.b16 %v1205
    %v1223 = vunpack.c.h.b16 %v1205
    %v1224 = vunpack.c.l.b16 %v1206
    %v1225 = vunpack.c.h.b16 %v1206
    %v1226 = vunpack.c.l.b16 %v1207
    %v1227 = vunpack.c.h.b16 %v1207
    %v1228 = vunpack.c.l.b16 %v1208
    %v1229 = vunpack.c.h.b16 %v1208
    %v1230 = vpack.c.b16 %v1218, %v1216
    %v1231 = vpack.c.b16 %v1219, %v1217
    %v1232 = vpack.c.b16 %v1222, %v1220
    %v1233 = vpack.c.b16 %v1223, %v1221
    %v1234 = vpack.c.b16 %v1226, %v1224
    %v1235 = vpack.c.b16 %v1227, %v1225
    %v1236 = vpack.c.b16 %v1228, %v1228
    %v1237 = vpack.c.b16 %v1229, %v1229
    %vm1244 = vcmask 408576
    %v1246 = vsel %vm1244, %v1194, 0
    %vm1248 = vcmask 1040384
    %v1250 = vsel %vm1248, %v1236, 0
    %v1253 = vsel %vm1248, %v1237, 0
    %1255 = vmatprep.subr.bf16.mxu0 %v1231
    %1256 = vmatpush1.bf16.msra.mxu0 %v1230
    %1257 = vmatprep.subr.bf16.mxu0 %v1233
    %1258 = vmatpush1.bf16.msra.mxu0 %v1232
    %1259 = vmatprep.subr.bf16.mxu0 %v1235
    %1260 = vmatpush1.bf16.msra.mxu0 %v1234
    %1261 = vmatprep.subr.bf16.mxu0 %v1253
    %1262 = vmatpush1.bf16.msra.mxu0 %v1250
    %1263 = vmatprep.subr.bf16.mxu0 0
    %1264 = vmatpush1.bf16.msra.mxu0 0
    %1265 = vmatprep.subr.bf16.mxu0 0
    %1266 = vmatpush1.bf16.msra.mxu0 0
    %1267 = vmatprep.subr.bf16.mxu0 0
    %1268 = vmatpush1.bf16.msra.mxu0 0
    %1269 = vmatprep.subr.bf16.mxu0 0
    %1270 = vmatpush1.bf16.msra.mxu0 0
    %1271 = vmatprep.subr.bf16.mxu0 0
    %1272 = vmatpush1.bf16.msra.mxu0 0
    %1273 = vmatprep.subr.bf16.mxu0 0
    %1274 = vmatpush1.bf16.msra.mxu0 0
    %1275 = vmatprep.subr.bf16.mxu0 0
    %1276 = vmatpush1.bf16.msra.mxu0 0
    %1277 = vmatprep.subr.bf16.mxu0 0
    %1278 = vmatpush1.bf16.msra.mxu0 0
    %1279 = vmatprep.subr.bf16.mxu0 0
    %1280 = vmatpush1.bf16.msra.mxu0 0
    %1281 = vmatprep.subr.bf16.mxu0 0
    %1282 = vmatpush1.bf16.msra.mxu0 0
    %1283 = vmatprep.subr.bf16.mxu0 0
    %1284 = vmatpush1.bf16.msra.mxu0 0
    %1285 = vmatprep.subr.bf16.mxu0 0
    %1286 = vmatpush1.bf16.msra.mxu0 0
    %1287 = vmatprep.mubr.bf16.mxu0 0
    %1288 = vmatmul.mubr.bf16.gmra.mrb[0].mxu0 %v1246
    %v1289 = vpop.f32.mrb[0].mxu0
    %v1290 = vadd.f32 0.0, %v1289
    %v1291 = vpop.f32.mrb[0].mxu0
    %v1292 = vadd.f32 0.0, %v1291
    %v1293 = vpop.f32.mrb[0].mxu0
    %v1294 = vpop.f32.mrb[0].mxu0
    %1295 = vdwg.mxu0
    %v1303 = vunpack.c.l.b16 %v1195
    %v1304 = vunpack.c.h.b16 %v1195
    %v1305 = vunpack.c.l.b16 %v1196
    %v1306 = vunpack.c.h.b16 %v1196
    %v1307 = vunpack.c.l.b16 %v1197
    %v1308 = vunpack.c.h.b16 %v1197
    %v1309 = vunpack.c.l.b16 %v1198
    %v1310 = vunpack.c.h.b16 %v1198
    %v1311 = vunpack.c.l.b16 %v1199
    %v1312 = vunpack.c.h.b16 %v1199
    %v1313 = vunpack.c.l.b16 %v1200
    %v1314 = vunpack.c.h.b16 %v1200
    %v1315 = vunpack.c.l.b16 %v1201
    %v1316 = vunpack.c.h.b16 %v1201
    %v1317 = vpack.c.b16 %v1305, %v1303
    %v1318 = vpack.c.b16 %v1306, %v1304
    %v1319 = vpack.c.b16 %v1309, %v1307
    %v1320 = vpack.c.b16 %v1310, %v1308
    %v1321 = vpack.c.b16 %v1313, %v1311
    %v1322 = vpack.c.b16 %v1314, %v1312
    %v1323 = vpack.c.b16 %v1315, %v1315
    %v1324 = vpack.c.b16 %v1316, %v1316
    %v1332 = vsel %vm1244, %v709, 0
    %v1335 = vsel %vm1248, %v1323, 0
    %v1338 = vsel %vm1248, %v1324, 0
    %1340 = vmatprep.subr.bf16.mxu0 %v1318
    %1341 = vmatpush1.bf16.msra.mxu0 %v1317
    %1342 = vmatprep.subr.bf16.mxu0 %v1320
    %1343 = vmatpush1.bf16.msra.mxu0 %v1319
    %1344 = vmatprep.subr.bf16.mxu0 %v1322
    %1345 = vmatpush1.bf16.msra.mxu0 %v1321
    %1346 = vmatprep.subr.bf16.mxu0 %v1338
    %1347 = vmatpush1.bf16.msra.mxu0 %v1335
    %1348 = vmatprep.subr.bf16.mxu0 0
    %1349 = vmatpush1.bf16.msra.mxu0 0
    %1350 = vmatprep.subr.bf16.mxu0 0
    %1351 = vmatpush1.bf16.msra.mxu0 0
    %1352 = vmatprep.subr.bf16.mxu0 0
    %1353 = vmatpush1.bf16.msra.mxu0 0
    %1354 = vmatprep.subr.bf16.mxu0 0
    %1355 = vmatpush1.bf16.msra.mxu0 0
    %1356 = vmatprep.subr.bf16.mxu0 0
    %1357 = vmatpush1.bf16.msra.mxu0 0
    %1358 = vmatprep.subr.bf16.mxu0 0
    %1359 = vmatpush1.bf16.msra.mxu0 0
    %1360 = vmatprep.subr.bf16.mxu0 0
    %1361 = vmatpush1.bf16.msra.mxu0 0
    %1362 = vmatprep.subr.bf16.mxu0 0
    %1363 = vmatpush1.bf16.msra.mxu0 0
    %1364 = vmatprep.subr.bf16.mxu0 0
    %1365 = vmatpush1.bf16.msra.mxu0 0
    %1366 = vmatprep.subr.bf16.mxu0 0
    %1367 = vmatpush1.bf16.msra.mxu0 0
    %1368 = vmatprep.subr.bf16.mxu0 0
    %1369 = vmatpush1.bf16.msra.mxu0 0
    %1370 = vmatprep.subr.bf16.mxu0 0
    %1371 = vmatpush1.bf16.msra.mxu0 0
    %1372 = vmatprep.mubr.bf16.mxu0 0
    %1373 = vmatmul.mubr.bf16.gmra.mrb[0].mxu0 %v1332
    %v1374 = vpop.f32.mrb[0].mxu0
    %v1375 = vadd.f32 %v1290, %v1374
    %v1376 = vpop.f32.mrb[0].mxu0
    %v1377 = vadd.f32 %v1292, %v1376
    %v1378 = vpop.f32.mrb[0].mxu0
    %v1379 = vpop.f32.mrb[0].mxu0
    %1380 = vdwg.mxu0
    %v1381 = vld [vmem:[#allocation7] sm:$0xff]
    %v1382 = vld [vmem:[#allocation7 + $0x8] sm:$0xff]
    %v1383 = vadd.f32 %v1375, %v1381
    %v1384 = vadd.f32 %v1377, %v1382
    %v1385 = vmax.f32 %v1383, 0.0
    %v1386 = vmax.f32 %v1384, 0.0
    %v1387 = vpack.c.bf16 %v1385, %v1385
    %v1388 = vpack.c.bf16 %v1386, %v1386
    %v1389 = vld [vmem:[#allocation19] sm:$0xf]
    %v1390 = vld [vmem:[#allocation19 + $0x4] sm:$0xf]
    %v1391 = vld [vmem:[#allocation19 + $0x8] sm:$0xf]
    %v1392 = vld [vmem:[#allocation19 + $0xc] sm:$0xf]
    %v1393 = vld [vmem:[#allocation19 + $0x10] sm:$0xf]
    %v1394 = vld [vmem:[#allocation19 + $0x14] sm:$0xf]
    %v1395 = vld [vmem:[#allocation19 + $0x18] sm:$0xf]
    %v1396 = vld [vmem:[#allocation19 + $0x1c] sm:$0xf]
    %v1397 = vld [vmem:[#allocation19 + $0x20] sm:$0xf]
    %v1398 = vld [vmem:[#allocation19 + $0x24] sm:$0xf]
    %v1399 = vld [vmem:[#allocation19 + $0x28] sm:$0xf]
    %v1400 = vld [vmem:[#allocation19 + $0x2c] sm:$0xf]
    %v1401 = vld [vmem:[#allocation19 + $0x30] sm:$0xf]
    %v1402 = vld [vmem:[#allocation19 + $0x34] sm:$0xf]
    %v1403 = vld [vmem:[#allocation19 + $0x38] sm:$0xf]
    %v1404 = vld [vmem:[#allocation19 + $0x3c] sm:$0xf]
    %v1405 = vld [vmem:[#allocation19 + $0x40] sm:$0xf]
    %v1406 = vld [vmem:[#allocation19 + $0x44] sm:$0xf]
    %v1407 = vld [vmem:[#allocation19 + $0x48] sm:$0xf]
    %v1408 = vld [vmem:[#allocation19 + $0x4c] sm:$0xf]
    %v1409 = vld [vmem:[#allocation19 + $0x50] sm:$0xf]
    %v1410 = vld [vmem:[#allocation19 + $0x54] sm:$0xf]
    %v1411 = vld [vmem:[#allocation19 + $0x58] sm:$0xf]
    %v1412 = vld [vmem:[#allocation19 + $0x5c] sm:$0xf]
    %v1413 = vld [vmem:[#allocation19 + $0x60] sm:$0xf]
    %v1414 = vld [vmem:[%s18] sm:$0x1]
    %v1416 = vlaneseq
    %v1417 = vshrl.u32 %v1416, 7
    %v1418 = vsub.s32 0, %v1417
    %v1419 = vrot.slane %v1414, %v1418
    %v1446 = vunpack.c.l.b16 %v1389
    %v1447 = vunpack.c.l.b16 %v1390
    %v1448 = vunpack.c.l.b16 %v1391
    %v1449 = vunpack.c.l.b16 %v1392
    %v1450 = vunpack.c.l.b16 %v1393
    %v1451 = vunpack.c.l.b16 %v1394
    %v1452 = vunpack.c.l.b16 %v1395
    %v1453 = vunpack.c.l.b16 %v1396
    %v1454 = vunpack.c.l.b16 %v1397
    %v1455 = vunpack.c.l.b16 %v1398
    %v1456 = vunpack.c.l.b16 %v1399
    %v1457 = vunpack.c.l.b16 %v1400
    %v1458 = vunpack.c.l.b16 %v1401
    %v1459 = vunpack.c.l.b16 %v1402
    %v1460 = vunpack.c.l.b16 %v1403
    %v1461 = vunpack.c.l.b16 %v1404
    %v1462 = vunpack.c.l.b16 %v1405
    %v1463 = vunpack.c.l.b16 %v1406
    %v1464 = vunpack.c.l.b16 %v1407
    %v1465 = vunpack.c.l.b16 %v1408
    %v1466 = vunpack.c.l.b16 %v1409
    %v1467 = vunpack.c.l.b16 %v1410
    %v1468 = vunpack.c.l.b16 %v1411
    %v1469 = vunpack.c.l.b16 %v1412
    %v1470 = vunpack.c.l.b16 %v1413
    %v1471 = vpack.c.b16 %v1447, %v1446
    %v1472 = vpack.c.b16 %v1449, %v1448
    %v1473 = vpack.c.b16 %v1451, %v1450
    %v1474 = vpack.c.b16 %v1453, %v1452
    %v1475 = vpack.c.b16 %v1455, %v1454
    %v1476 = vpack.c.b16 %v1457, %v1456
    %v1477 = vpack.c.b16 %v1459, %v1458
    %v1478 = vpack.c.b16 %v1461, %v1460
    %v1479 = vpack.c.b16 %v1463, %v1462
    %v1480 = vpack.c.b16 %v1465, %v1464
    %v1481 = vpack.c.b16 %v1467, %v1466
    %v1482 = vpack.c.b16 %v1469, %v1468
    %v1483 = vpack.c.b16 %v1470, %v1470
    %v1497 = vsel %vm390, %v1388, 0
    %v1500 = vsel %vm394, %v1483, 0
    %1502 = vmatprep.subr.bf16.mxu0 0
    %1503 = vmatpush1.bf16.msra.mxu0 %v1471
    %1504 = vmatprep.subr.bf16.mxu0 0
    %1505 = vmatpush1.bf16.msra.mxu0 %v1472
    %1506 = vmatprep.subr.bf16.mxu0 0
    %1507 = vmatpush1.bf16.msra.mxu0 %v1473
    %1508 = vmatprep.subr.bf16.mxu0 0
    %1509 = vmatpush1.bf16.msra.mxu0 %v1474
    %1510 = vmatprep.subr.bf16.mxu0 0
    %1511 = vmatpush1.bf16.msra.mxu0 %v1475
    %1512 = vmatprep.subr.bf16.mxu0 0
    %1513 = vmatpush1.bf16.msra.mxu0 %v1476
    %1514 = vmatprep.subr.bf16.mxu0 0
    %1515 = vmatpush1.bf16.msra.mxu0 %v1477
    %1516 = vmatprep.subr.bf16.mxu0 0
    %1517 = vmatpush1.bf16.msra.mxu0 %v1478
    %1518 = vmatprep.subr.bf16.mxu0 0
    %1519 = vmatpush1.bf16.msra.mxu0 %v1479
    %1520 = vmatprep.subr.bf16.mxu0 0
    %1521 = vmatpush1.bf16.msra.mxu0 %v1480
    %1522 = vmatprep.subr.bf16.mxu0 0
    %1523 = vmatpush1.bf16.msra.mxu0 %v1481
    %1524 = vmatprep.subr.bf16.mxu0 0
    %1525 = vmatpush1.bf16.msra.mxu0 %v1482
    %1526 = vmatprep.subr.bf16.mxu0 0
    %1527 = vmatpush1.bf16.msra.mxu0 %v1500
    %1528 = vmatprep.subr.bf16.mxu0 0
    %1529 = vmatpush1.bf16.msra.mxu0 0
    %1530 = vmatprep.subr.bf16.mxu0 0
    %1531 = vmatpush1.bf16.msra.mxu0 0
    %1532 = vmatprep.subr.bf16.mxu0 0
    %1533 = vmatpush1.bf16.msra.mxu0 0
    %1534 = vmatprep.mubr.bf16.mxu0 %v1497
    %1535 = vmatmul.mubr.bf16.gmra.mrb[0].mxu0 %v1387
    %v1536 = vpop.f32.mrb[0].mxu0
    %v1537 = vadd.f32 %v1419, %v1536
    %v1538 = vpop.f32.mrb[0].mxu0
    %v1539 = vpop.f32.mrb[0].mxu0
    %v1540 = vpop.f32.mrb[0].mxu0
    %1541 = vdwg.mxu0
    %v1542 = vmax.f32 %v1537, 0.0
    %v1543 = vpack.c.bf16 %v1542, %v1542
    %v1544 = vld [vmem:[#allocation20] sm:$0xf]
    %v1545 = vld [vmem:[#allocation20 + $0x4] sm:$0xf]
    %v1546 = vld [vmem:[#allocation20 + $0x8] sm:$0xf]
    %v1547 = vld [vmem:[#allocation20 + $0xc] sm:$0xf]
    %v1548 = vld [vmem:[#allocation20 + $0x10] sm:$0xf]
    %v1549 = vld [vmem:[#allocation20 + $0x14] sm:$0xf]
    %v1550 = vld [vmem:[#allocation20 + $0x18] sm:$0xf]
    %v1551 = vld [vmem:[#allocation20 + $0x1c] sm:$0xf]
    %v1552 = vld [vmem:[#allocation20 + $0x20] sm:$0xf]
    %v1553 = vld [vmem:[#allocation20 + $0x24] sm:$0xf]
    %v1554 = vld [vmem:[#allocation20 + $0x28] sm:$0xf]
    %v1555 = vld [vmem:[#allocation20 + $0x2c] sm:$0xf]
    %v1556 = vld [vmem:[#allocation20 + $0x30] sm:$0x3]
    %v1557 = vld [vmem:[%s20] sm:$0x1]
    %v1559 = vlaneseq
    %v1560 = vshrl.u32 %v1559, 7
    %v1561 = vsub.s32 0, %v1560
    %v1562 = vrot.slane %v1557, %v1561
    %v1577 = vunpack.c.l.b16 %v1544
    %v1578 = vunpack.c.l.b16 %v1545
    %v1579 = vunpack.c.l.b16 %v1546
    %v1580 = vunpack.c.l.b16 %v1547
    %v1581 = vunpack.c.l.b16 %v1548
    %v1582 = vunpack.c.l.b16 %v1549
    %v1583 = vunpack.c.l.b16 %v1550
    %v1584 = vunpack.c.l.b16 %v1551
    %v1585 = vunpack.c.l.b16 %v1552
    %v1586 = vunpack.c.l.b16 %v1553
    %v1587 = vunpack.c.l.b16 %v1554
    %v1588 = vunpack.c.l.b16 %v1555
    %v1589 = vunpack.c.l.b16 %v1556
    %v1590 = vpack.c.b16 %v1578, %v1577
    %v1591 = vpack.c.b16 %v1580, %v1579
    %v1592 = vpack.c.b16 %v1582, %v1581
    %v1593 = vpack.c.b16 %v1584, %v1583
    %v1594 = vpack.c.b16 %v1586, %v1585
    %v1595 = vpack.c.b16 %v1588, %v1587
    %v1596 = vpack.c.b16 %v1589, %v1589
    %v1604 = vsel %vm660, %v1543, 0
    %v1607 = vsel %vm664, %v1596, 0
    %1609 = vmatprep.subr.bf16.mxu0 0
    %1610 = vmatpush1.bf16.msra.mxu0 %v1590
    %1611 = vmatprep.subr.bf16.mxu0 0
    %1612 = vmatpush1.bf16.msra.mxu0 %v1591
    %1613 = vmatprep.subr.bf16.mxu0 0
    %1614 = vmatpush1.bf16.msra.mxu0 %v1592
    %1615 = vmatprep.subr.bf16.mxu0 0
    %1616 = vmatpush1.bf16.msra.mxu0 %v1593
    %1617 = vmatprep.subr.bf16.mxu0 0
    %1618 = vmatpush1.bf16.msra.mxu0 %v1594
    %1619 = vmatprep.subr.bf16.mxu0 0
    %1620 = vmatpush1.bf16.msra.mxu0 %v1595
    %1621 = vmatprep.subr.bf16.mxu0 0
    %1622 = vmatpush1.bf16.msra.mxu0 %v1607
    %1623 = vmatprep.subr.bf16.mxu0 0
    %1624 = vmatpush1.bf16.msra.mxu0 0
    %1625 = vmatprep.subr.bf16.mxu0 0
    %1626 = vmatpush1.bf16.msra.mxu0 0
    %1627 = vmatprep.subr.bf16.mxu0 0
    %1628 = vmatpush1.bf16.msra.mxu0 0
    %1629 = vmatprep.subr.bf16.mxu0 0
    %1630 = vmatpush1.bf16.msra.mxu0 0
    %1631 = vmatprep.subr.bf16.mxu0 0
    %1632 = vmatpush1.bf16.msra.mxu0 0
    %1633 = vmatprep.subr.bf16.mxu0 0
    %1634 = vmatpush1.bf16.msra.mxu0 0
    %1635 = vmatprep.subr.bf16.mxu0 0
    %1636 = vmatpush1.bf16.msra.mxu0 0
    %1637 = vmatprep.subr.bf16.mxu0 0
    %1638 = vmatpush1.bf16.msra.mxu0 0
    %1639 = vmatprep.subr.bf16.mxu0 0
    %1640 = vmatpush1.bf16.msra.mxu0 0
    %1641 = vmatprep.mubr.bf16.mxu0 0
    %1642 = vmatmul.mubr.bf16.gmra.mrb[0].mxu0 %v1604
    %v1643 = vpop.f32.mrb[0].mxu0
    %v1644 = vadd.f32 %v1562, %v1643
    %v1645 = vpop.f32.mrb[0].mxu0
    %v1646 = vpop.f32.mrb[0].mxu0
    %v1647 = vpop.f32.mrb[0].mxu0
    %1648 = vdwg.mxu0
    %1649 = vst [vmem:[#allocation22] sm:$0xff] %v1644
    // Predicated region
    $region134: #{tpu_custom_call.1} parent=1 // pred_check
      _
    $region135: #{tpu_custom_call.1} parent=1 // pred_check_branch
      %1651 = sbr.rel (0) target = $region137
    $region136: #{tpu_custom_call.1} parent=1 // pred_region
      %s1653 = ssub.s32 128, 128
      %1654 = vsyncadd [#allocation4], %s1653
      %s1656 = sshll.u32 [#allocation22], 4
      %s1657 = int_to_ptr.vmem [resolvable:$true] %s1656
      %1659 = dma.vmem_to_hbm [thread:$0]  %s1657, 128, %s21, [#allocation4]
    $region137: #{tpu_custom_call.1} parent=1 // pred_fallthru
      _
    // Predicated region
    $region138: #{tpu_custom_call.1} parent=1 // pred_check
      _
    $region139: #{tpu_custom_call.1} parent=1 // pred_check_branch
      %1661 = sbr.rel (0) target = $region141
    $region140: #{tpu_custom_call.1} parent=1 // pred_region
      %1662 = dma.done [#allocation4], 128
    $region141: #{tpu_custom_call.1} parent=1 // pred_fallthru
      _
    %1663 = vsyncpa [#allocation3], 1
    %1664 = vsyncpa [#allocation6], 1
    %1665 = vsyncpa [#allocation9], 1
    %1666 = vsyncpa [#allocation12], 1
    %1667 = vsyncpa [#allocation15], 1
    %1668 = vsyncpa [#allocation18], 1
    %1669 = vsyncpa [#allocation21], 1
    %1670 = vsyncpa [#allocation4], 1

</llo_original>
